<compile_context>
chip_gen: v5e
topology: v5e:2x2
jax: 0.10.0
libtpu: 0.0.40
codegen_flags: <defaults>
</compile_context>

<pallas_src>
import jax
import jax.numpy as jnp
from jax.experimental import pallas as pl
from jax.experimental.pallas import tpu as pltpu

H = W = 16            # input spatial size
CIN = 3               # input channels (RGB)
C1 = 16               # conv1 output channels
C2 = 32               # conv2 output channels (aux feature dim)
HP = WP = 8           # pooled spatial size
BB_FEAT = 576         # mobilenet_v3_small feature dim (classifier = Identity)
HIDDEN = 128
NUM_CLASSES = 2
NC_PAD = 128          # classes padded 2 -> 128 for a lane-dense output store
BT_MAX = 32           # batch-tile cap (multiple of 8)
BN_EPS = 1e-5


def _round_up(n, m):
    return ((n + m - 1) // m) * m


def _shift_rows(a, dh):
    """s[h] = a[h + dh] where valid, 0 otherwise; shift along the leading axis only."""
    if dh == 0:
        return a
    zeros = jnp.zeros((abs(dh),) + a.shape[1:], a.dtype)
    if dh > 0:
        return jnp.concatenate([a[dh:], zeros], axis=0)
    return jnp.concatenate([zeros, a[:dh]], axis=0)


# ---------------------------------------------------------------------------
# Single fused kernel: aux conv stream + backbone stand-in + fusion head.
# One grid step processes a batch tile of BT images; all intermediates stay in
# VMEM / vregs; the only HBM traffic is the compact input rows + padded logits.
# ---------------------------------------------------------------------------
def _dual_stream_kernel(x_ref, w1_ref, b1_ref, w2_ref, b2_ref,
                        wbb_ref, bbb_ref, w1dl_ref, w1aux_ref, b1f_ref,
                        w2f_ref, b2f_ref, out_ref):
    bt = x_ref.shape[1]
    x = x_ref[...]                                             # (16, bt, 48) [h, b, w*3+c]

    # ---- conv1 (3->16, 3x3, pad=1): one GEMM vs the W-Toeplitz bands + 3 H shifts
    c1 = jnp.dot(x.reshape(H * bt, W * CIN), w1_ref[...],
                 preferred_element_type=jnp.float32).reshape(H, bt, 3 * 256)
    y1 = (_shift_rows(c1[:, :, 0:256], -1)          # kernel row kh=0
          + c1[:, :, 256:512]                       # kh=1
          + _shift_rows(c1[:, :, 512:768], +1)      # kh=2
          + b1_ref[...].reshape(1, 1, 256))
    y1 = jnp.maximum(y1, 0.0)                       # (16, bt, 256); col = parity*128+j*16+oc

    # ---- maxpool 2x2: H via even/odd leading rows, W via the two 128-lane halves
    y1 = y1.reshape(HP, 2, bt, 256)
    yh = jnp.maximum(y1[:, 0], y1[:, 1])                       # (8, bt, 256)
    p = jnp.maximum(yh[:, :, 0:128], yh[:, :, 128:256])        # (8, bt, 128) [h, b, w*16+ic]

    # ---- conv2 (16->32, 3x3, pad=1): one GEMM vs the W-Toeplitz bands + 3 H shifts
    c2 = jnp.dot(p.reshape(HP * bt, 128), w2_ref[...],
                 preferred_element_type=jnp.float32).reshape(HP, bt, 3 * 256)
    y2 = (_shift_rows(c2[:, :, 0:256], -1)
          + c2[:, :, 256:512]
          + _shift_rows(c2[:, :, 512:768], +1)
          + b2_ref[...].reshape(1, 1, 256))
    y2 = jnp.maximum(y2, 0.0)                                  # (8, bt, 256) [h, b, w*32+oc]

    # ---- AdaptiveAvgPool2d(1) folded into the fusion GEMM (w1aux rows pre-tiled / 64)
    y2s = jnp.sum(y2, axis=0)                                  # (bt, 256)

    # ---- backbone stand-in: GAP folded into wbb (rows pre-tiled / 256) -> Linear -> ReLU
    # TODO(synk): the pretrained MobileNetV3-Small backbone is not re-implemented;
    # this deterministic GAP + Linear(3->576) + ReLU stand-in keeps the graph shape.
    xs = jnp.sum(x, axis=0)                                    # (bt, 48)
    feat_dl = jnp.maximum(
        jnp.dot(xs, wbb_ref[...], preferred_element_type=jnp.float32) + bbb_ref[...],
        0.0)                                                   # (bt, 576)

    # ---- fusion head: Dropout(eval)=id; concat split into two GEMMs; BN(eval) folded
    h = (jnp.dot(feat_dl, w1dl_ref[...], preferred_element_type=jnp.float32)
         + jnp.dot(y2s, w1aux_ref[...], preferred_element_type=jnp.float32)
         + b1f_ref[...])
    h = jnp.maximum(h, 0.0)                                    # (bt, 128)
    out_ref[...] = (jnp.dot(h, w2f_ref[...], preferred_element_type=jnp.float32)
                    + b2f_ref[...])                            # (bt, 128) lane-dense store


# ---------------------------------------------------------------------------
# Wrapper: weight packing (Toeplitz bands, GAP / avg-pool / BN folding) in plain
# XLA (tiny, fused under jit), then one pallas_call over fixed-size batch tiles.
# ---------------------------------------------------------------------------
def _conv_bands(w_hwio, width):
    """W-direction Toeplitz bands: (3, width*Cin, width*Cout), one per kernel row."""
    _, kw, cin, cout = w_hwio.shape
    k = jnp.arange(kw)
    wi = jnp.arange(width)
    wo = jnp.arange(width)
    sel = (wi[None, :, None] == wo[None, None, :] + k[:, None, None] - 1)
    sel = sel.astype(jnp.float32)                              # (3, w_in, w_out)
    # band[kh, w_in, cin, w_out, cout]
    return jnp.einsum('kiu,hkco->hicuo', sel, w_hwio)


def dual_stream_net(x_nchw, params):
    B = x_nchw.shape[0]
    x = x_nchw.astype(jnp.float32)

    bt = min(BT_MAX, _round_up(max(B, 1), 8))
    b_pad = _round_up(B, bt)
    num_tiles = b_pad // bt

    # (B,3,16,16) NCHW -> (H, B, W*C) compact row layout; zero-pad batch to b_pad.
    x_rows = jnp.transpose(x, (2, 0, 3, 1)).reshape(H, B, W * CIN)
    if b_pad != B:
        x_rows = jnp.pad(x_rows, ((0, 0), (0, b_pad - B), (0, 0)))

    # ---- conv1 bands; output columns reordered to (parity, j, oc) so the W-maxpool
    #      becomes a max of the two aligned 128-lane halves.
    band1 = _conv_bands(params["w1c"], W)                      # (3, 16, 3, 16, 16)
    band1 = band1.reshape(3, W * CIN, WP, 2, C1).transpose(0, 1, 3, 2, 4)
    band1 = band1.reshape(3, W * CIN, 2 * WP * C1)
    wband1 = band1.transpose(1, 0, 2).reshape(W * CIN, 3 * 256)          # (48, 768)
    b1r = jnp.tile(params["b1c"], W).reshape(1, 256)                     # col%16 = oc

    # ---- conv2 bands on the pooled 8x8 map; columns = w_out*32 + oc
    band2 = _conv_bands(params["w2c"], WP)                     # (3, 8, 16, 8, 32)
    band2 = band2.reshape(3, WP * C1, WP * C2)
    wband2 = band2.transpose(1, 0, 2).reshape(WP * C1, 3 * 256)          # (128, 768)
    b2r = jnp.tile(params["b2c"], WP).reshape(1, 256)                    # col%32 = oc

    # ---- backbone stand-in: fold the GAP (mean over 16x16) into the projection
    wbb_big = jnp.tile(params["w_bb"], (W, 1)) / float(H * W)            # (48, 576)
    bbb = params["b_bb"].reshape(1, BB_FEAT)

    # ---- fusion fc1: fold eval-mode BatchNorm1d into the weights / bias (exact)
    scale = params["gamma"] * jax.lax.rsqrt(params["rvar"] + BN_EPS)     # (128,)
    shift = params["beta"] - params["rmean"] * scale
    w1f_s = params["w1f"] * scale[None, :]                               # (608, 128)
    b1f_s = (params["b1f"] * scale + shift).reshape(1, HIDDEN)
    w1dl = w1f_s[:BB_FEAT]                                               # (576, 128)
    # aux part: fold AdaptiveAvgPool2d(1) (sum over 8x8 / 64) into the weight rows
    w1aux = jnp.tile(w1f_s[BB_FEAT:], (WP, 1)) / float(HP * WP)          # (256, 128)

    # ---- fusion fc2: pad classes 2 -> 128 for a lane-dense store
    w2f_p = jnp.pad(params["w2f"], ((0, 0), (0, NC_PAD - NUM_CLASSES)))  # (128, 128)
    b2f_p = jnp.pad(params["b2f"], (0, NC_PAD - NUM_CLASSES)).reshape(1, NC_PAD)

    full = lambda r, c: pl.BlockSpec((r, c), lambda i: (0, 0))

    out = pl.pallas_call(
        _dual_stream_kernel,
        out_shape=jax.ShapeDtypeStruct((b_pad, NC_PAD), jnp.float32),
        grid=(num_tiles,),
        in_specs=[
            pl.BlockSpec((H, bt, W * CIN), lambda i: (0, i, 0)),  # input rows (batch-tiled)
            full(W * CIN, 3 * 256), full(1, 256),                 # conv1 bands, bias
            full(WP * C1, 3 * 256), full(1, 256),                 # conv2 bands, bias
            full(W * CIN, BB_FEAT), full(1, BB_FEAT),             # backbone stub (GAP folded)
            full(BB_FEAT, HIDDEN),                                 # fusion fc1 (dl part, BN folded)
            full(WP * C2, HIDDEN),                                 # fusion fc1 (aux, pool+BN folded)
            full(1, HIDDEN),                                       # fusion fc1 bias (BN folded)
            full(HIDDEN, NC_PAD), full(1, NC_PAD),                 # fusion fc2 (padded)
        ],
        out_specs=pl.BlockSpec((bt, NC_PAD), lambda i: (i, 0)),
        compiler_params=pltpu.CompilerParams(
            dimension_semantics=("parallel",),
            vmem_limit_bytes=32 * 1024 * 1024),
    )(x_rows, wband1, b1r, wband2, b2r, wbb_big, bbb,
      w1dl, w1aux, b1f_s, w2f_p, b2f_p)

    return out[:B, :NUM_CLASSES]                                 # (B, 2)


def init_params(key):
    ks = jax.random.split(key, 8)
    s = 0.05
    return {
        # aux_stream conv weights stored HWIO (PyTorch stores OIHW)
        "w1c": s * jax.random.normal(ks[0], (3, 3, CIN, C1), jnp.float32),
        "b1c": s * jax.random.normal(ks[1], (C1,), jnp.float32),
        "w2c": s * jax.random.normal(ks[2], (3, 3, C1, C2), jnp.float32),
        "b2c": s * jax.random.normal(ks[3], (C2,), jnp.float32),
        # backbone stand-in projection
        "w_bb": s * jax.random.normal(ks[4], (CIN, BB_FEAT), jnp.float32),
        "b_bb": s * jax.random.normal(ks[5], (BB_FEAT,), jnp.float32),
        # fusion: Linear weights stored (in, out) (PyTorch stores (out, in))
        "w1f": s * jax.random.normal(ks[6], (BB_FEAT + C2, HIDDEN), jnp.float32),
        "b1f": jnp.zeros((HIDDEN,), jnp.float32),
        "gamma": jnp.ones((HIDDEN,), jnp.float32),
        "beta": jnp.zeros((HIDDEN,), jnp.float32),
        "rmean": jnp.zeros((HIDDEN,), jnp.float32),
        "rvar": jnp.ones((HIDDEN,), jnp.float32),
        "w2f": s * jax.random.normal(ks[7], (HIDDEN, NUM_CLASSES), jnp.float32),
        "b2f": jnp.zeros((NUM_CLASSES,), jnp.float32),
    }


if __name__ == "__main__":
    key = jax.random.PRNGKey(0)
    kx, kp = jax.random.split(key)
    x = jax.random.normal(kx, (2, CIN, H, W), jnp.float32)   # NCHW, like PyTorch
    params = init_params(kp)

    out = jax.jit(dual_stream_net)(x, params)
    out = jax.block_until_ready(out)
    assert out.shape == (2, NUM_CLASSES) and out.dtype == jnp.float32
    assert bool(jnp.all(jnp.isfinite(out)))
    print("KERNEL_OK")
</pallas_src>

<mosaic_0001>
module attributes {stable_mosaic.version = 11 : i64} {
  func.func @_dual_stream_kernel(%arg0: i32, %arg1: memref<16x8x48xf32, #tpu.memory_space<vmem>>, %arg2: memref<48x768xf32, #tpu.memory_space<vmem>>, %arg3: memref<1x256xf32, #tpu.memory_space<vmem>>, %arg4: memref<128x768xf32, #tpu.memory_space<vmem>>, %arg5: memref<1x256xf32, #tpu.memory_space<vmem>>, %arg6: memref<48x576xf32, #tpu.memory_space<vmem>>, %arg7: memref<1x576xf32, #tpu.memory_space<vmem>>, %arg8: memref<576x128xf32, #tpu.memory_space<vmem>>, %arg9: memref<256x128xf32, #tpu.memory_space<vmem>>, %arg10: memref<1x128xf32, #tpu.memory_space<vmem>>, %arg11: memref<128x128xf32, #tpu.memory_space<vmem>>, %arg12: memref<1x128xf32, #tpu.memory_space<vmem>>, %arg13: memref<8x128xf32, #tpu.memory_space<vmem>>) attributes {dimension_semantics = [#tpu.dimension_semantics<parallel>], iteration_bounds = array<i64: 1>, scalar_prefetch = 0 : i64, scratch_operands = 0 : i64, tpu.core_type = #tpu.core_type<tc>, window_params = [{transform_indices = @transform_0, window_bounds = array<i64: 16, 8, 48>}, {pipeline_mode = #tpu.pipeline_mode<synchronous>, transform_indices = @transform_1, window_bounds = array<i64: 48, 768>}, {pipeline_mode = #tpu.pipeline_mode<synchronous>, transform_indices = @transform_2, window_bounds = array<i64: 1, 256>}, {pipeline_mode = #tpu.pipeline_mode<synchronous>, transform_indices = @transform_3, window_bounds = array<i64: 128, 768>}, {pipeline_mode = #tpu.pipeline_mode<synchronous>, transform_indices = @transform_4, window_bounds = array<i64: 1, 256>}, {pipeline_mode = #tpu.pipeline_mode<synchronous>, transform_indices = @transform_5, window_bounds = array<i64: 48, 576>}, {pipeline_mode = #tpu.pipeline_mode<synchronous>, transform_indices = @transform_6, window_bounds = array<i64: 1, 576>}, {pipeline_mode = #tpu.pipeline_mode<synchronous>, transform_indices = @transform_7, window_bounds = array<i64: 576, 128>}, {pipeline_mode = #tpu.pipeline_mode<synchronous>, transform_indices = @transform_8, window_bounds = array<i64: 256, 128>}, {pipeline_mode = #tpu.pipeline_mode<synchronous>, transform_indices = @transform_9, window_bounds = array<i64: 1, 128>}, {pipeline_mode = #tpu.pipeline_mode<synchronous>, transform_indices = @transform_10, window_bounds = array<i64: 128, 128>}, {pipeline_mode = #tpu.pipeline_mode<synchronous>, transform_indices = @transform_11, window_bounds = array<i64: 1, 128>}, {transform_indices = @transform_12, window_bounds = array<i64: 8, 128>}]} {
    %c0 = arith.constant 0 : index
    %c0_0 = arith.constant 0 : index
    %c0_1 = arith.constant 0 : index
    %0 = vector.load %arg1[%c0, %c0_0, %c0_1] : memref<16x8x48xf32, #tpu.memory_space<vmem>>, vector<16x8x48xf32>
    %1 = vector.shape_cast %0 : vector<16x8x48xf32> to vector<128x48xf32>
    %c0_2 = arith.constant 0 : index
    %c0_3 = arith.constant 0 : index
    %2 = vector.load %arg2[%c0_2, %c0_3] : memref<48x768xf32, #tpu.memory_space<vmem>>, vector<48x768xf32>
    %cst = arith.constant dense<0.000000e+00> : vector<128x768xf32>
    %3 = tpu.matmul %1, %2, %cst {dimension_numbers = #tpu.dot_dimension_numbers<[1], [0], [0], [1], [0, 0, 1, 1], [], []>} : vector<128x48xf32>, vector<48x768xf32>, vector<128x768xf32> -> vector<128x768xf32>
    %4 = vector.shape_cast %3 : vector<128x768xf32> to vector<16x8x768xf32>
    %5 = vector.extract_strided_slice %4 {offsets = [0, 0, 0], sizes = [16, 8, 256], strides = [1, 1, 1]} : vector<16x8x768xf32> to vector<16x8x256xf32>
    %cst_4 = arith.constant 0.000000e+00 : f32
    %6 = vector.broadcast %cst_4 : f32 to vector<1x8x256xf32>
    %7 = vector.extract_strided_slice %5 {offsets = [0, 0, 0], sizes = [15, 8, 256], strides = [1, 1, 1]} : vector<16x8x256xf32> to vector<15x8x256xf32>
    %8 = tpu.concatenate %6, %7 in 0 : vector<1x8x256xf32>, vector<15x8x256xf32> -> vector<16x8x256xf32>
    %9 = vector.extract_strided_slice %4 {offsets = [0, 0, 256], sizes = [16, 8, 256], strides = [1, 1, 1]} : vector<16x8x768xf32> to vector<16x8x256xf32>
    %10 = arith.addf %8, %9 : vector<16x8x256xf32>
    %11 = vector.extract_strided_slice %4 {offsets = [0, 0, 512], sizes = [16, 8, 256], strides = [1, 1, 1]} : vector<16x8x768xf32> to vector<16x8x256xf32>
    %cst_5 = arith.constant 0.000000e+00 : f32
    %12 = vector.broadcast %cst_5 : f32 to vector<1x8x256xf32>
    %13 = vector.extract_strided_slice %11 {offsets = [1, 0, 0], sizes = [15, 8, 256], strides = [1, 1, 1]} : vector<16x8x256xf32> to vector<15x8x256xf32>
    %14 = tpu.concatenate %13, %12 in 0 : vector<15x8x256xf32>, vector<1x8x256xf32> -> vector<16x8x256xf32>
    %15 = arith.addf %10, %14 : vector<16x8x256xf32>
    %c0_6 = arith.constant 0 : index
    %c0_7 = arith.constant 0 : index
    %16 = vector.load %arg3[%c0_6, %c0_7] : memref<1x256xf32, #tpu.memory_space<vmem>>, vector<1x256xf32>
    %17 = vector.shape_cast %16 : vector<1x256xf32> to vector<1x1x256xf32>
    %18 = vector.broadcast %17 : vector<1x1x256xf32> to vector<16x8x256xf32>
    %19 = arith.addf %15, %18 : vector<16x8x256xf32>
    %cst_8 = arith.constant 0.000000e+00 : f32
    %20 = vector.broadcast %cst_8 : f32 to vector<16x8x256xf32>
    %21 = arith.maximumf %19, %20 : vector<16x8x256xf32>
    %22 = vector.shape_cast %21 : vector<16x8x256xf32> to vector<8x2x8x256xf32>
    %23 = vector.extract_strided_slice %22 {offsets = [0, 0, 0, 0], sizes = [8, 1, 8, 256], strides = [1, 1, 1, 1]} : vector<8x2x8x256xf32> to vector<8x1x8x256xf32>
    %24 = vector.shape_cast %23 : vector<8x1x8x256xf32> to vector<8x8x256xf32>
    %25 = vector.extract_strided_slice %22 {offsets = [0, 1, 0, 0], sizes = [8, 1, 8, 256], strides = [1, 1, 1, 1]} : vector<8x2x8x256xf32> to vector<8x1x8x256xf32>
    %26 = vector.shape_cast %25 : vector<8x1x8x256xf32> to vector<8x8x256xf32>
    %27 = arith.maximumf %24, %26 : vector<8x8x256xf32>
    %28 = vector.extract_strided_slice %27 {offsets = [0, 0, 0], sizes = [8, 8, 128], strides = [1, 1, 1]} : vector<8x8x256xf32> to vector<8x8x128xf32>
    %29 = vector.extract_strided_slice %27 {offsets = [0, 0, 128], sizes = [8, 8, 128], strides = [1, 1, 1]} : vector<8x8x256xf32> to vector<8x8x128xf32>
    %30 = arith.maximumf %28, %29 : vector<8x8x128xf32>
    %31 = vector.shape_cast %30 : vector<8x8x128xf32> to vector<64x128xf32>
    %c0_9 = arith.constant 0 : index
    %c0_10 = arith.constant 0 : index
    %32 = vector.load %arg4[%c0_9, %c0_10] : memref<128x768xf32, #tpu.memory_space<vmem>>, vector<128x768xf32>
    %cst_11 = arith.constant dense<0.000000e+00> : vector<64x768xf32>
    %33 = tpu.matmul %31, %32, %cst_11 {dimension_numbers = #tpu.dot_dimension_numbers<[1], [0], [0], [1], [0, 0, 1, 1], [], []>} : vector<64x128xf32>, vector<128x768xf32>, vector<64x768xf32> -> vector<64x768xf32>
    %34 = vector.shape_cast %33 : vector<64x768xf32> to vector<8x8x768xf32>
    %35 = vector.extract_strided_slice %34 {offsets = [0, 0, 0], sizes = [8, 8, 256], strides = [1, 1, 1]} : vector<8x8x768xf32> to vector<8x8x256xf32>
    %cst_12 = arith.constant 0.000000e+00 : f32
    %36 = vector.broadcast %cst_12 : f32 to vector<1x8x256xf32>
    %37 = vector.extract_strided_slice %35 {offsets = [0, 0, 0], sizes = [7, 8, 256], strides = [1, 1, 1]} : vector<8x8x256xf32> to vector<7x8x256xf32>
    %38 = tpu.concatenate %36, %37 in 0 : vector<1x8x256xf32>, vector<7x8x256xf32> -> vector<8x8x256xf32>
    %39 = vector.extract_strided_slice %34 {offsets = [0, 0, 256], sizes = [8, 8, 256], strides = [1, 1, 1]} : vector<8x8x768xf32> to vector<8x8x256xf32>
    %40 = arith.addf %38, %39 : vector<8x8x256xf32>
    %41 = vector.extract_strided_slice %34 {offsets = [0, 0, 512], sizes = [8, 8, 256], strides = [1, 1, 1]} : vector<8x8x768xf32> to vector<8x8x256xf32>
    %cst_13 = arith.constant 0.000000e+00 : f32
    %42 = vector.broadcast %cst_13 : f32 to vector<1x8x256xf32>
    %43 = vector.extract_strided_slice %41 {offsets = [1, 0, 0], sizes = [7, 8, 256], strides = [1, 1, 1]} : vector<8x8x256xf32> to vector<7x8x256xf32>
    %44 = tpu.concatenate %43, %42 in 0 : vector<7x8x256xf32>, vector<1x8x256xf32> -> vector<8x8x256xf32>
    %45 = arith.addf %40, %44 : vector<8x8x256xf32>
    %c0_14 = arith.constant 0 : index
    %c0_15 = arith.constant 0 : index
    %46 = vector.load %arg5[%c0_14, %c0_15] : memref<1x256xf32, #tpu.memory_space<vmem>>, vector<1x256xf32>
    %47 = vector.shape_cast %46 : vector<1x256xf32> to vector<1x1x256xf32>
    %48 = vector.broadcast %47 : vector<1x1x256xf32> to vector<8x8x256xf32>
    %49 = arith.addf %45, %48 : vector<8x8x256xf32>
    %cst_16 = arith.constant 0.000000e+00 : f32
    %50 = vector.broadcast %cst_16 : f32 to vector<8x8x256xf32>
    %51 = arith.maximumf %49, %50 : vector<8x8x256xf32>
    %cst_17 = arith.constant dense<0.000000e+00> : vector<8x256xf32>
    %52 = vector.multi_reduction <add>, %51, %cst_17 [0] : vector<8x8x256xf32> to vector<8x256xf32>
    %cst_18 = arith.constant dense<0.000000e+00> : vector<8x48xf32>
    %53 = vector.multi_reduction <add>, %0, %cst_18 [0] : vector<16x8x48xf32> to vector<8x48xf32>
    %c0_19 = arith.constant 0 : index
    %c0_20 = arith.constant 0 : index
    %54 = vector.load %arg6[%c0_19, %c0_20] : memref<48x576xf32, #tpu.memory_space<vmem>>, vector<48x576xf32>
    %cst_21 = arith.constant dense<0.000000e+00> : vector<8x576xf32>
    %55 = tpu.matmul %53, %54, %cst_21 {dimension_numbers = #tpu.dot_dimension_numbers<[1], [0], [0], [1], [0, 0, 1, 1], [], []>} : vector<8x48xf32>, vector<48x576xf32>, vector<8x576xf32> -> vector<8x576xf32>
    %c0_22 = arith.constant 0 : index
    %c0_23 = arith.constant 0 : index
    %56 = vector.load %arg7[%c0_22, %c0_23] : memref<1x576xf32, #tpu.memory_space<vmem>>, vector<1x576xf32>
    %57 = vector.broadcast %56 : vector<1x576xf32> to vector<8x576xf32>
    %58 = arith.addf %55, %57 : vector<8x576xf32>
    %cst_24 = arith.constant 0.000000e+00 : f32
    %59 = vector.broadcast %cst_24 : f32 to vector<8x576xf32>
    %60 = arith.maximumf %58, %59 : vector<8x576xf32>
    %c0_25 = arith.constant 0 : index
    %c0_26 = arith.constant 0 : index
    %61 = vector.load %arg8[%c0_25, %c0_26] : memref<576x128xf32, #tpu.memory_space<vmem>>, vector<576x128xf32>
    %cst_27 = arith.constant dense<0.000000e+00> : vector<8x128xf32>
    %62 = tpu.matmul %60, %61, %cst_27 {dimension_numbers = #tpu.dot_dimension_numbers<[1], [0], [0], [1], [0, 0, 1, 1], [], []>} : vector<8x576xf32>, vector<576x128xf32>, vector<8x128xf32> -> vector<8x128xf32>
    %c0_28 = arith.constant 0 : index
    %c0_29 = arith.constant 0 : index
    %63 = vector.load %arg9[%c0_28, %c0_29] : memref<256x128xf32, #tpu.memory_space<vmem>>, vector<256x128xf32>
    %cst_30 = arith.constant dense<0.000000e+00> : vector<8x128xf32>
    %64 = tpu.matmul %52, %63, %cst_30 {dimension_numbers = #tpu.dot_dimension_numbers<[1], [0], [0], [1], [0, 0, 1, 1], [], []>} : vector<8x256xf32>, vector<256x128xf32>, vector<8x128xf32> -> vector<8x128xf32>
    %65 = arith.addf %62, %64 : vector<8x128xf32>
    %c0_31 = arith.constant 0 : index
    %c0_32 = arith.constant 0 : index
    %66 = vector.load %arg10[%c0_31, %c0_32] : memref<1x128xf32, #tpu.memory_space<vmem>>, vector<1x128xf32>
    %67 = vector.broadcast %66 : vector<1x128xf32> to vector<8x128xf32>
    %68 = arith.addf %65, %67 : vector<8x128xf32>
    %cst_33 = arith.constant 0.000000e+00 : f32
    %69 = vector.broadcast %cst_33 : f32 to vector<8x128xf32>
    %70 = arith.maximumf %68, %69 : vector<8x128xf32>
    %c0_34 = arith.constant 0 : index
    %c0_35 = arith.constant 0 : index
    %71 = vector.load %arg11[%c0_34, %c0_35] : memref<128x128xf32, #tpu.memory_space<vmem>>, vector<128x128xf32>
    %cst_36 = arith.constant dense<0.000000e+00> : vector<8x128xf32>
    %72 = tpu.matmul %70, %71, %cst_36 {dimension_numbers = #tpu.dot_dimension_numbers<[1], [0], [0], [1], [0, 0, 1, 1], [], []>} : vector<8x128xf32>, vector<128x128xf32>, vector<8x128xf32> -> vector<8x128xf32>
    %c0_37 = arith.constant 0 : index
    %c0_38 = arith.constant 0 : index
    %73 = vector.load %arg12[%c0_37, %c0_38] : memref<1x128xf32, #tpu.memory_space<vmem>>, vector<1x128xf32>
    %74 = vector.broadcast %73 : vector<1x128xf32> to vector<8x128xf32>
    %75 = arith.addf %72, %74 : vector<8x128xf32>
    %c0_39 = arith.constant 0 : index
    %c0_40 = arith.constant 0 : index
    %76 = vector.load %arg13[%c0_39, %c0_40] : memref<8x128xf32, #tpu.memory_space<vmem>>, vector<8x128xf32>
    tpu.vector_store %arg13[%c0_39, %c0_40], %75 {strides = array<i32>} : memref<8x128xf32, #tpu.memory_space<vmem>>, vector<8x128xf32>,
    return
  }
  func.func @transform_0(%arg0: i32) -> (i32, i32, i32) {
    %c0_i32 = arith.constant 0 : i32
    %c0_i32_0 = arith.constant 0 : i32
    %c0_i32_1 = arith.constant 0 : i32
    return %c0_i32, %arg0, %c0_i32_0 : i32, i32, i32
  }
  func.func @transform_1(%arg0: i32) -> (i32, i32) {
    %c0_i32 = arith.constant 0 : i32
    %c0_i32_0 = arith.constant 0 : i32
    %c0_i32_1 = arith.constant 0 : i32
    return %c0_i32, %c0_i32_0 : i32, i32
  }
  func.func @transform_2(%arg0: i32) -> (i32, i32) {
    %c0_i32 = arith.constant 0 : i32
    %c0_i32_0 = arith.constant 0 : i32
    %c0_i32_1 = arith.constant 0 : i32
    return %c0_i32, %c0_i32_0 : i32, i32
  }
  func.func @transform_3(%arg0: i32) -> (i32, i32) {
    %c0_i32 = arith.constant 0 : i32
    %c0_i32_0 = arith.constant 0 : i32
    %c0_i32_1 = arith.constant 0 : i32
    return %c0_i32, %c0_i32_0 : i32, i32
  }
  func.func @transform_4(%arg0: i32) -> (i32, i32) {
    %c0_i32 = arith.constant 0 : i32
    %c0_i32_0 = arith.constant 0 : i32
    %c0_i32_1 = arith.constant 0 : i32
    return %c0_i32, %c0_i32_0 : i32, i32
  }
  func.func @transform_5(%arg0: i32) -> (i32, i32) {
    %c0_i32 = arith.constant 0 : i32
    %c0_i32_0 = arith.constant 0 : i32
    %c0_i32_1 = arith.constant 0 : i32
    return %c0_i32, %c0_i32_0 : i32, i32
  }
  func.func @transform_6(%arg0: i32) -> (i32, i32) {
    %c0_i32 = arith.constant 0 : i32
    %c0_i32_0 = arith.constant 0 : i32
    %c0_i32_1 = arith.constant 0 : i32
    return %c0_i32, %c0_i32_0 : i32, i32
  }
  func.func @transform_7(%arg0: i32) -> (i32, i32) {
    %c0_i32 = arith.constant 0 : i32
    %c0_i32_0 = arith.constant 0 : i32
    %c0_i32_1 = arith.constant 0 : i32
    return %c0_i32, %c0_i32_0 : i32, i32
  }
  func.func @transform_8(%arg0: i32) -> (i32, i32) {
    %c0_i32 = arith.constant 0 : i32
    %c0_i32_0 = arith.constant 0 : i32
    %c0_i32_1 = arith.constant 0 : i32
    return %c0_i32, %c0_i32_0 : i32, i32
  }
  func.func @transform_9(%arg0: i32) -> (i32, i32) {
    %c0_i32 = arith.constant 0 : i32
    %c0_i32_0 = arith.constant 0 : i32
    %c0_i32_1 = arith.constant 0 : i32
    return %c0_i32, %c0_i32_0 : i32, i32
  }
  func.func @transform_10(%arg0: i32) -> (i32, i32) {
    %c0_i32 = arith.constant 0 : i32
    %c0_i32_0 = arith.constant 0 : i32
    %c0_i32_1 = arith.constant 0 : i32
    return %c0_i32, %c0_i32_0 : i32, i32
  }
  func.func @transform_11(%arg0: i32) -> (i32, i32) {
    %c0_i32 = arith.constant 0 : i32
    %c0_i32_0 = arith.constant 0 : i32
    %c0_i32_1 = arith.constant 0 : i32
    return %c0_i32, %c0_i32_0 : i32, i32
  }
  func.func @transform_12(%arg0: i32) -> (i32, i32) {
    %c0_i32 = arith.constant 0 : i32
    %c0_i32_0 = arith.constant 0 : i32
    return %arg0, %c0_i32 : i32, i32
  }
}

</mosaic_0001>

<llo_original>
// kernel: tile.23
$region0: #{tile.23}
  #allocation0 [shape = 's32[1]{0}', space=sflag, size = 0x4, scoped, tag = 'scoped memory for tile.23']
  %s0 = inlined_call_operand.vmem [shape: f32[16], index: 0, kind: input, shape index: {}]
  %s1 = inlined_call_operand.vmem [shape: f32[16,16], index: 1, kind: output, shape index: {}]
  // Predicated region
  $region2: #{tile.23} parent=0 // pred_check
    _
  $region3: #{tile.23} parent=0 // pred_check_branch
    %3 = sbr.rel (0) target = $region5
  $region4: #{tile.23} parent=0 // pred_region
    _
  $region5: #{tile.23} parent=0 // pred_fallthru
    _
  %v4 = vld [vmem:[%s0] ss:$0 sm:$0xff]
  %5 = vst [vmem:[%s1] sm:$0xff] %v4
  %s6 = scalar_lea.vmem %s1, 8
  %7 = vst [vmem:[%s6] sm:$0xff] %v4

// kernel: tile.24
$region0: #{tile.24}
  %s0 = inlined_call_operand.vmem [shape: f32[16,16], index: 0, kind: input, shape index: {}]
  %s1 = inlined_call_operand.vmem [shape: f32[1,256], index: 1, kind: output, shape index: {}]
  $region1: #{tile.24} parent=0
    #allocation0 [shape = 'u8[8192]{0}', space=vmem, size = 0x2000, scoped, tag = 'scoped mem for output reshape']
    %s2 = smov 3
    %v3 = vld [vmem:[%s0] ss:$8 sm:%s2]
    %vm4 = vcmask 130048
    %5 = vst.msk [vmem:[#allocation0] ss:$8 sm:$0x3] %vm4, %v3
    %s6 = scalar_lea.vmem %s0, 7
    %s7 = smov 3
    %v8 = vld [vmem:[%s6] ss:$8 sm:%s7]
    %9 = vrot.lane.b32.xlu0 %v8, 112
    %v10 = vpop.permute.xlu0 %9
    %vm11 = vcmask 1048448
    %12 = vst.msk [vmem:[#allocation0] ss:$8 sm:$0x3] %vm11, %v10
    %s13 = scalar_lea.vmem %s0, 6
    %s14 = smov 3
    %v15 = vld [vmem:[%s13] ss:$8 sm:%s14]
    %16 = vrot.lane.b32.xlu0 %v15, 96
    %v17 = vpop.permute.xlu0 %16
    %vm18 = vcmask 917248
    %19 = vst.msk [vmem:[#allocation0] ss:$8 sm:$0x3] %vm18, %v17
    %s20 = scalar_lea.vmem %s0, 5
    %s21 = smov 3
    %v22 = vld [vmem:[%s20] ss:$8 sm:%s21]
    %23 = vrot.lane.b32.xlu0 %v22, 80
    %v24 = vpop.permute.xlu0 %23
    %vm25 = vcmask 786048
    %26 = vst.msk [vmem:[#allocation0] ss:$8 sm:$0x3] %vm25, %v24
    %s27 = scalar_lea.vmem %s0, 4
    %s28 = smov 3
    %v29 = vld [vmem:[%s27] ss:$8 sm:%s28]
    %30 = vrot.lane.b32.xlu0 %v29, 64
    %v31 = vpop.permute.xlu0 %30
    %vm32 = vcmask 654848
    %33 = vst.msk [vmem:[#allocation0] ss:$8 sm:$0x3] %vm32, %v31
    %s34 = scalar_lea.vmem %s0, 3
    %s35 = smov 3
    %v36 = vld [vmem:[%s34] ss:$8 sm:%s35]
    %37 = vrot.lane.b32.xlu0 %v36, 48
    %v38 = vpop.permute.xlu0 %37
    %vm39 = vcmask 523648
    %40 = vst.msk [vmem:[#allocation0] ss:$8 sm:$0x3] %vm39, %v38
    %s41 = scalar_lea.vmem %s0, 2
    %s42 = smov 3
    %v43 = vld [vmem:[%s41] ss:$8 sm:%s42]
    %44 = vrot.lane.b32.xlu0 %v43, 32
    %v45 = vpop.permute.xlu0 %44
    %vm46 = vcmask 392448
    %47 = vst.msk [vmem:[#allocation0] ss:$8 sm:$0x3] %vm46, %v45
    %s48 = scalar_lea.vmem %s0, 1
    %s49 = smov 3
    %v50 = vld [vmem:[%s48] ss:$8 sm:%s49]
    %51 = vrot.lane.b32.xlu0 %v50, 16
    %v52 = vpop.permute.xlu0 %51
    %vm53 = vcmask 261248
    %54 = vst.msk [vmem:[#allocation0] ss:$8 sm:$0x3] %vm53, %v52
    %s56 = ssub.s32 2, 1
    %v57 = vld [vmem:[#allocation0] sm:%s56]
    %s59 = ssub.s32 2, 1
    %60 = vst [vmem:[%s1] sm:%s59] %v57
    %s61 = scalar_lea.vmem [#allocation0], 8
    %v62 = vld [vmem:[%s61] sm:%s56]
    %s64 = ssub.s32 2, 1
    %s65 = scalar_lea.vmem %s1, 1
    %66 = vst [vmem:[%s65] sm:%s64] %v62

// kernel: tile.28
$region0: #{tile.28}
  #allocation0 [shape = 's32[1]{0}', space=sflag, size = 0x4, scoped, tag = 'scoped memory for tile.28']
  %s0 = inlined_call_operand.vmem [shape: f32[32], index: 0, kind: input, shape index: {}]
  %s1 = inlined_call_operand.vmem [shape: f32[8,32], index: 1, kind: output, shape index: {}]
  // Predicated region
  $region2: #{tile.28} parent=0 // pred_check
    _
  $region3: #{tile.28} parent=0 // pred_check_branch
    %3 = sbr.rel (0) target = $region5
  $region4: #{tile.28} parent=0 // pred_region
    _
  $region5: #{tile.28} parent=0 // pred_fallthru
    _
  %v4 = vld [vmem:[%s0] ss:$0 sm:$0xff]
  %5 = vst [vmem:[%s1] sm:$0xff] %v4

// kernel: tile.29
$region0: #{tile.29}
  %s0 = inlined_call_operand.vmem [shape: f32[8,32], index: 0, kind: input, shape index: {}]
  %s1 = inlined_call_operand.vmem [shape: f32[1,256], index: 1, kind: output, shape index: {}]
  $region1: #{tile.29} parent=0
    #allocation0 [shape = 'u8[8192]{0}', space=vmem, size = 0x2000, scoped, tag = 'scoped mem for output reshape']
    %s2 = smov 3
    %v3 = vld [vmem:[%s0] ss:$4 sm:%s2]
    %vm4 = vcmask 261120
    %5 = vst.msk [vmem:[#allocation0] ss:$8 sm:$0x3] %vm4, %v3
    %s6 = scalar_lea.vmem %s0, 3
    %s7 = smov 3
    %v8 = vld [vmem:[%s6] ss:$4 sm:%s7]
    %9 = vrot.lane.b32.xlu0 %v8, 96
    %v10 = vpop.permute.xlu0 %9
    %vm11 = vcmask 1048320
    %12 = vst.msk [vmem:[#allocation0] ss:$8 sm:$0x3] %vm11, %v10
    %s13 = scalar_lea.vmem %s0, 2
    %s14 = smov 3
    %v15 = vld [vmem:[%s13] ss:$4 sm:%s14]
    %16 = vrot.lane.b32.xlu0 %v15, 64
    %v17 = vpop.permute.xlu0 %16
    %vm18 = vcmask 785920
    %19 = vst.msk [vmem:[#allocation0] ss:$8 sm:$0x3] %vm18, %v17
    %s20 = scalar_lea.vmem %s0, 1
    %s21 = smov 3
    %v22 = vld [vmem:[%s20] ss:$4 sm:%s21]
    %23 = vrot.lane.b32.xlu0 %v22, 32
    %v24 = vpop.permute.xlu0 %23
    %vm25 = vcmask 523520
    %26 = vst.msk [vmem:[#allocation0] ss:$8 sm:$0x3] %vm25, %v24
    %s28 = ssub.s32 2, 1
    %v29 = vld [vmem:[#allocation0] sm:%s28]
    %s31 = ssub.s32 2, 1
    %32 = vst [vmem:[%s1] sm:%s31] %v29
    %s33 = scalar_lea.vmem [#allocation0], 8
    %v34 = vld [vmem:[%s33] sm:%s28]
    %s36 = ssub.s32 2, 1
    %s37 = scalar_lea.vmem %s1, 1
    %38 = vst [vmem:[%s37] sm:%s36] %v34

// kernel: dual_stream_net.1
$region0: #{dual_stream_net.1}
  #allocation0 [shape = 'u32[]', space=smem, size = 0x4, offset = 0x4, fixed_abs, tag = 'smem constant byte address 0x4 - core index']
  #allocation1 [shape = 'u32[72,128]{1,0:T(1,128)}', space=vmem, size = 0x9000, scoped, tag = 'internal scratch']
  %s0 = inlined_call_operand.vmem [shape: f32[16,8,48], index: 0, kind: input, shape index: {}]
  %s1 = inlined_call_operand.vmem [shape: f32[48,768], index: 1, kind: input, shape index: {}]
  %s2 = inlined_call_operand.vmem [shape: f32[1,256], index: 2, kind: input, shape index: {}]
  %s3 = inlined_call_operand.vmem [shape: f32[128,768], index: 3, kind: input, shape index: {}]
  %s4 = inlined_call_operand.vmem [shape: f32[1,256], index: 4, kind: input, shape index: {}]
  %s5 = inlined_call_operand.vmem [shape: f32[48,576], index: 5, kind: input, shape index: {}]
  %s6 = inlined_call_operand.vmem [shape: f32[1,576], index: 6, kind: input, shape index: {}]
  %s7 = inlined_call_operand.vmem [shape: f32[576,128], index: 7, kind: input, shape index: {}]
  %s8 = inlined_call_operand.vmem [shape: f32[256,128], index: 8, kind: input, shape index: {}]
  %s9 = inlined_call_operand.vmem [shape: f32[1,128], index: 9, kind: input, shape index: {}]
  %s10 = inlined_call_operand.vmem [shape: f32[128,128], index: 10, kind: input, shape index: {}]
  %s11 = inlined_call_operand.vmem [shape: f32[1,128], index: 11, kind: input, shape index: {}]
  %s12 = inlined_call_operand.vmem [shape: f32[8,128], index: 12, kind: output, shape index: {}]
  %s13 = sld [smem:[#allocation0]]
  $region58: #{dual_stream_net.1} parent=0
    _
  %s15 = ssub.s32 1, %s13
  %s16 = scalar_select 0, %s15, %s13
  // Predicated region
  $region2: #{dual_stream_net.1} parent=0 // pred_check
    _
  $region3: #{dual_stream_net.1} parent=0 // pred_check_branch
    %18 = sbr.rel (0) target = $region5
  $region4: #{dual_stream_net.1} parent=0 // pred_region
    _
  $region5: #{dual_stream_net.1} parent=0 // pred_fallthru
    _
  // Predicated region
  $region6: #{dual_stream_net.1} parent=0 // pred_check
    _
  $region7: #{dual_stream_net.1} parent=0 // pred_check_branch
    %20 = sbr.rel (0) target = $region9
  $region8: #{dual_stream_net.1} parent=0 // pred_region
    _
  $region9: #{dual_stream_net.1} parent=0 // pred_fallthru
    _
  // Predicated region
  $region10: #{dual_stream_net.1} parent=0 // pred_check
    _
  $region11: #{dual_stream_net.1} parent=0 // pred_check_branch
    %22 = sbr.rel (0) target = $region13
  $region12: #{dual_stream_net.1} parent=0 // pred_region
    _
  $region13: #{dual_stream_net.1} parent=0 // pred_fallthru
    _
  // Predicated region
  $region14: #{dual_stream_net.1} parent=0 // pred_check
    _
  $region15: #{dual_stream_net.1} parent=0 // pred_check_branch
    %24 = sbr.rel (0) target = $region17
  $region16: #{dual_stream_net.1} parent=0 // pred_region
    _
  $region17: #{dual_stream_net.1} parent=0 // pred_fallthru
    _
  // Predicated region
  $region18: #{dual_stream_net.1} parent=0 // pred_check
    _
  $region19: #{dual_stream_net.1} parent=0 // pred_check_branch
    %26 = sbr.rel (0) target = $region21
  $region20: #{dual_stream_net.1} parent=0 // pred_region
    _
  $region21: #{dual_stream_net.1} parent=0 // pred_fallthru
    _
  // Predicated region
  $region22: #{dual_stream_net.1} parent=0 // pred_check
    _
  $region23: #{dual_stream_net.1} parent=0 // pred_check_branch
    %28 = sbr.rel (0) target = $region25
  $region24: #{dual_stream_net.1} parent=0 // pred_region
    _
  $region25: #{dual_stream_net.1} parent=0 // pred_fallthru
    _
  // Predicated region
  $region26: #{dual_stream_net.1} parent=0 // pred_check
    _
  $region27: #{dual_stream_net.1} parent=0 // pred_check_branch
    %30 = sbr.rel (0) target = $region29
  $region28: #{dual_stream_net.1} parent=0 // pred_region
    _
  $region29: #{dual_stream_net.1} parent=0 // pred_fallthru
    _
  // Predicated region
  $region30: #{dual_stream_net.1} parent=0 // pred_check
    _
  $region31: #{dual_stream_net.1} parent=0 // pred_check_branch
    %32 = sbr.rel (0) target = $region33
  $region32: #{dual_stream_net.1} parent=0 // pred_region
    _
  $region33: #{dual_stream_net.1} parent=0 // pred_fallthru
    _
  // Predicated region
  $region34: #{dual_stream_net.1} parent=0 // pred_check
    _
  $region35: #{dual_stream_net.1} parent=0 // pred_check_branch
    %34 = sbr.rel (0) target = $region37
  $region36: #{dual_stream_net.1} parent=0 // pred_region
    _
  $region37: #{dual_stream_net.1} parent=0 // pred_fallthru
    _
  // Predicated region
  $region38: #{dual_stream_net.1} parent=0 // pred_check
    _
  $region39: #{dual_stream_net.1} parent=0 // pred_check_branch
    %36 = sbr.rel (0) target = $region41
  $region40: #{dual_stream_net.1} parent=0 // pred_region
    _
  $region41: #{dual_stream_net.1} parent=0 // pred_fallthru
    _
  // Predicated region
  $region42: #{dual_stream_net.1} parent=0 // pred_check
    _
  $region43: #{dual_stream_net.1} parent=0 // pred_check_branch
    %38 = sbr.rel (0) target = $region45
  $region44: #{dual_stream_net.1} parent=0 // pred_region
    _
  $region45: #{dual_stream_net.1} parent=0 // pred_fallthru
    _
  // Predicated region
  $region46: #{dual_stream_net.1} parent=0 // pred_check
    _
  $region47: #{dual_stream_net.1} parent=0 // pred_check_branch
    %40 = sbr.rel (0) target = $region49
  $region48: #{dual_stream_net.1} parent=0 // pred_region
    _
  $region49: #{dual_stream_net.1} parent=0 // pred_fallthru
    _
  %v41 = vld [vmem:[%s0] sm:$0xff]
  %v42 = vld [vmem:[%s0 + $0x8] sm:$0xff]
  %v43 = vld [vmem:[%s0 + $0x10] sm:$0xff]
  %v44 = vld [vmem:[%s0 + $0x18] sm:$0xff]
  %v45 = vld [vmem:[%s0 + $0x20] sm:$0xff]
  %v46 = vld [vmem:[%s0 + $0x28] sm:$0xff]
  %v47 = vld [vmem:[%s0 + $0x30] sm:$0xff]
  %v48 = vld [vmem:[%s0 + $0x38] sm:$0xff]
  %v49 = vld [vmem:[%s0 + $0x40] sm:$0xff]
  %v50 = vld [vmem:[%s0 + $0x48] sm:$0xff]
  %v51 = vld [vmem:[%s0 + $0x50] sm:$0xff]
  %v52 = vld [vmem:[%s0 + $0x58] sm:$0xff]
  %v53 = vld [vmem:[%s0 + $0x60] sm:$0xff]
  %v54 = vld [vmem:[%s0 + $0x68] sm:$0xff]
  %v55 = vld [vmem:[%s0 + $0x70] sm:$0xff]
  %v56 = vld [vmem:[%s0 + $0x78] sm:$0xff]
  %v57 = vld [vmem:[%s1] sm:$0xff]
  %v58 = vld [vmem:[%s1 + $0x8] sm:$0xff]
  %v59 = vld [vmem:[%s1 + $0x10] sm:$0xff]
  %v60 = vld [vmem:[%s1 + $0x18] sm:$0xff]
  %v61 = vld [vmem:[%s1 + $0x20] sm:$0xff]
  %v62 = vld [vmem:[%s1 + $0x28] sm:$0xff]
  %v63 = vld [vmem:[%s1 + $0x30] sm:$0xff]
  %v64 = vld [vmem:[%s1 + $0x38] sm:$0xff]
  %v65 = vld [vmem:[%s1 + $0x40] sm:$0xff]
  %v66 = vld [vmem:[%s1 + $0x48] sm:$0xff]
  %v67 = vld [vmem:[%s1 + $0x50] sm:$0xff]
  %v68 = vld [vmem:[%s1 + $0x58] sm:$0xff]
  %v69 = vld [vmem:[%s1 + $0x60] sm:$0xff]
  %v70 = vld [vmem:[%s1 + $0x68] sm:$0xff]
  %v71 = vld [vmem:[%s1 + $0x70] sm:$0xff]
  %v72 = vld [vmem:[%s1 + $0x78] sm:$0xff]
  %v73 = vld [vmem:[%s1 + $0x80] sm:$0xff]
  %v74 = vld [vmem:[%s1 + $0x88] sm:$0xff]
  %v75 = vld [vmem:[%s1 + $0x90] sm:$0xff]
  %v76 = vld [vmem:[%s1 + $0x98] sm:$0xff]
  %v77 = vld [vmem:[%s1 + $0xa0] sm:$0xff]
  %v78 = vld [vmem:[%s1 + $0xa8] sm:$0xff]
  %v79 = vld [vmem:[%s1 + $0xb0] sm:$0xff]
  %v80 = vld [vmem:[%s1 + $0xb8] sm:$0xff]
  %v81 = vld [vmem:[%s1 + $0xc0] sm:$0xff]
  %v82 = vld [vmem:[%s1 + $0xc8] sm:$0xff]
  %v83 = vld [vmem:[%s1 + $0xd0] sm:$0xff]
  %v84 = vld [vmem:[%s1 + $0xd8] sm:$0xff]
  %v85 = vld [vmem:[%s1 + $0xe0] sm:$0xff]
  %v86 = vld [vmem:[%s1 + $0xe8] sm:$0xff]
  %v87 = vld [vmem:[%s1 + $0xf0] sm:$0xff]
  %v88 = vld [vmem:[%s1 + $0xf8] sm:$0xff]
  %v89 = vld [vmem:[%s1 + $0x100] sm:$0xff]
  %v90 = vld [vmem:[%s1 + $0x108] sm:$0xff]
  %v91 = vld [vmem:[%s1 + $0x110] sm:$0xff]
  %v92 = vld [vmem:[%s1 + $0x118] sm:$0xff]
  %vm93 = vcmask 392192
  %v95 = vsel %vm93, %v41, 0
  %v98 = vsel %vm93, %v42, 0
  %v101 = vsel %vm93, %v43, 0
  %v104 = vsel %vm93, %v44, 0
  %v107 = vsel %vm93, %v45, 0
  %v110 = vsel %vm93, %v46, 0
  %v113 = vsel %vm93, %v47, 0
  %v116 = vsel %vm93, %v48, 0
  %v119 = vsel %vm93, %v49, 0
  %v122 = vsel %vm93, %v50, 0
  %v125 = vsel %vm93, %v51, 0
  %v128 = vsel %vm93, %v52, 0
  %v131 = vsel %vm93, %v53, 0
  %v134 = vsel %vm93, %v54, 0
  %v137 = vsel %vm93, %v55, 0
  %v140 = vsel %vm93, %v56, 0
  %142 = vmatpush.msra.mxu0 0.0
  %143 = vmatpush.msra.mxu0 0.0
  %144 = vmatpush.msra.mxu0 0.0
  %145 = vmatpush.msra.mxu0 0.0
  %146 = vmatpush.msra.mxu0 0.0
  %147 = vmatpush.msra.mxu0 0.0
  %148 = vmatpush.msra.mxu0 0.0
  %149 = vmatpush.msra.mxu0 0.0
  %150 = vmatpush.msra.mxu0 0.0
  %151 = vmatpush.msra.mxu0 0.0
  %152 = vmatpush.msra.mxu0 %v87
  %153 = vmatpush.msra.mxu0 %v81
  %154 = vmatpush.msra.mxu0 %v75
  %155 = vmatpush.msra.mxu0 %v69
  %156 = vmatpush.msra.mxu0 %v63
  %157 = vmatpush.msra.mxu0 %v57
  %158 = vmatmul.f32.gmra.mxu0 %v95
  %v159 = vpop.f32.mrf.mxu0
  %v160 = vadd.f32 0.0, %v159
  %161 = vmatmul.f32.gmra.mxu0 %v98
  %v162 = vpop.f32.mrf.mxu0
  %v163 = vadd.f32 0.0, %v162
  %164 = vmatmul.f32.gmra.mxu0 %v101
  %v165 = vpop.f32.mrf.mxu0
  %v166 = vadd.f32 0.0, %v165
  %167 = vmatmul.f32.gmra.mxu0 %v104
  %v168 = vpop.f32.mrf.mxu0
  %v169 = vadd.f32 0.0, %v168
  %170 = vmatmul.f32.gmra.mxu0 %v107
  %v171 = vpop.f32.mrf.mxu0
  %v172 = vadd.f32 0.0, %v171
  %173 = vmatmul.f32.gmra.mxu0 %v110
  %v174 = vpop.f32.mrf.mxu0
  %v175 = vadd.f32 0.0, %v174
  %176 = vmatmul.f32.gmra.mxu0 %v113
  %v177 = vpop.f32.mrf.mxu0
  %v178 = vadd.f32 0.0, %v177
  %179 = vmatmul.f32.gmra.mxu0 %v116
  %v180 = vpop.f32.mrf.mxu0
  %v181 = vadd.f32 0.0, %v180
  %182 = vmatmul.f32.gmra.mxu0 %v119
  %v183 = vpop.f32.mrf.mxu0
  %v184 = vadd.f32 0.0, %v183
  %185 = vmatmul.f32.gmra.mxu0 %v122
  %v186 = vpop.f32.mrf.mxu0
  %v187 = vadd.f32 0.0, %v186
  %188 = vmatmul.f32.gmra.mxu0 %v125
  %v189 = vpop.f32.mrf.mxu0
  %v190 = vadd.f32 0.0, %v189
  %191 = vmatmul.f32.gmra.mxu0 %v128
  %v192 = vpop.f32.mrf.mxu0
  %v193 = vadd.f32 0.0, %v192
  %194 = vmatmul.f32.gmra.mxu0 %v131
  %v195 = vpop.f32.mrf.mxu0
  %v196 = vadd.f32 0.0, %v195
  %197 = vmatmul.f32.gmra.mxu0 %v134
  %v198 = vpop.f32.mrf.mxu0
  %v199 = vadd.f32 0.0, %v198
  %200 = vmatmul.f32.gmra.mxu0 %v137
  %v201 = vpop.f32.mrf.mxu0
  %v202 = vadd.f32 0.0, %v201
  %203 = vmatmul.f32.gmra.mxu0 %v140
  %v204 = vpop.f32.mrf.mxu0
  %205 = vdwg.mxu0
  %206 = vmatpush.msra.mxu0 0.0
  %207 = vmatpush.msra.mxu0 0.0
  %208 = vmatpush.msra.mxu0 0.0
  %209 = vmatpush.msra.mxu0 0.0
  %210 = vmatpush.msra.mxu0 0.0
  %211 = vmatpush.msra.mxu0 0.0
  %212 = vmatpush.msra.mxu0 0.0
  %213 = vmatpush.msra.mxu0 0.0
  %214 = vmatpush.msra.mxu0 0.0
  %215 = vmatpush.msra.mxu0 0.0
  %216 = vmatpush.msra.mxu0 %v88
  %217 = vmatpush.msra.mxu0 %v82
  %218 = vmatpush.msra.mxu0 %v76
  %219 = vmatpush.msra.mxu0 %v70
  %220 = vmatpush.msra.mxu0 %v64
  %221 = vmatpush.msra.mxu0 %v58
  %222 = vmatmul.f32.gmra.mxu0 %v95
  %v223 = vpop.f32.mrf.mxu0
  %v224 = vadd.f32 0.0, %v223
  %225 = vmatmul.f32.gmra.mxu0 %v98
  %v226 = vpop.f32.mrf.mxu0
  %v227 = vadd.f32 0.0, %v226
  %228 = vmatmul.f32.gmra.mxu0 %v101
  %v229 = vpop.f32.mrf.mxu0
  %v230 = vadd.f32 0.0, %v229
  %231 = vmatmul.f32.gmra.mxu0 %v104
  %v232 = vpop.f32.mrf.mxu0
  %v233 = vadd.f32 0.0, %v232
  %234 = vmatmul.f32.gmra.mxu0 %v107
  %v235 = vpop.f32.mrf.mxu0
  %v236 = vadd.f32 0.0, %v235
  %237 = vmatmul.f32.gmra.mxu0 %v110
  %v238 = vpop.f32.mrf.mxu0
  %v239 = vadd.f32 0.0, %v238
  %240 = vmatmul.f32.gmra.mxu0 %v113
  %v241 = vpop.f32.mrf.mxu0
  %v242 = vadd.f32 0.0, %v241
  %243 = vmatmul.f32.gmra.mxu0 %v116
  %v244 = vpop.f32.mrf.mxu0
  %v245 = vadd.f32 0.0, %v244
  %246 = vmatmul.f32.gmra.mxu0 %v119
  %v247 = vpop.f32.mrf.mxu0
  %v248 = vadd.f32 0.0, %v247
  %249 = vmatmul.f32.gmra.mxu0 %v122
  %v250 = vpop.f32.mrf.mxu0
  %v251 = vadd.f32 0.0, %v250
  %252 = vmatmul.f32.gmra.mxu0 %v125
  %v253 = vpop.f32.mrf.mxu0
  %v254 = vadd.f32 0.0, %v253
  %255 = vmatmul.f32.gmra.mxu0 %v128
  %v256 = vpop.f32.mrf.mxu0
  %v257 = vadd.f32 0.0, %v256
  %258 = vmatmul.f32.gmra.mxu0 %v131
  %v259 = vpop.f32.mrf.mxu0
  %v260 = vadd.f32 0.0, %v259
  %261 = vmatmul.f32.gmra.mxu0 %v134
  %v262 = vpop.f32.mrf.mxu0
  %v263 = vadd.f32 0.0, %v262
  %264 = vmatmul.f32.gmra.mxu0 %v137
  %v265 = vpop.f32.mrf.mxu0
  %v266 = vadd.f32 0.0, %v265
  %267 = vmatmul.f32.gmra.mxu0 %v140
  %v268 = vpop.f32.mrf.mxu0
  %269 = vdwg.mxu0
  %270 = vmatpush.msra.mxu0 0.0
  %271 = vmatpush.msra.mxu0 0.0
  %272 = vmatpush.msra.mxu0 0.0
  %273 = vmatpush.msra.mxu0 0.0
  %274 = vmatpush.msra.mxu0 0.0
  %275 = vmatpush.msra.mxu0 0.0
  %276 = vmatpush.msra.mxu0 0.0
  %277 = vmatpush.msra.mxu0 0.0
  %278 = vmatpush.msra.mxu0 0.0
  %279 = vmatpush.msra.mxu0 0.0
  %280 = vmatpush.msra.mxu0 %v89
  %281 = vmatpush.msra.mxu0 %v83
  %282 = vmatpush.msra.mxu0 %v77
  %283 = vmatpush.msra.mxu0 %v71
  %284 = vmatpush.msra.mxu0 %v65
  %285 = vmatpush.msra.mxu0 %v59
  %286 = vmatmul.f32.gmra.mxu0 %v95
  %v287 = vpop.f32.mrf.mxu0
  %v288 = vadd.f32 0.0, %v287
  %289 = vmatmul.f32.gmra.mxu0 %v98
  %v290 = vpop.f32.mrf.mxu0
  %v291 = vadd.f32 0.0, %v290
  %292 = vmatmul.f32.gmra.mxu0 %v101
  %v293 = vpop.f32.mrf.mxu0
  %v294 = vadd.f32 0.0, %v293
  %295 = vmatmul.f32.gmra.mxu0 %v104
  %v296 = vpop.f32.mrf.mxu0
  %v297 = vadd.f32 0.0, %v296
  %298 = vmatmul.f32.gmra.mxu0 %v107
  %v299 = vpop.f32.mrf.mxu0
  %v300 = vadd.f32 0.0, %v299
  %301 = vmatmul.f32.gmra.mxu0 %v110
  %v302 = vpop.f32.mrf.mxu0
  %v303 = vadd.f32 0.0, %v302
  %304 = vmatmul.f32.gmra.mxu0 %v113
  %v305 = vpop.f32.mrf.mxu0
  %v306 = vadd.f32 0.0, %v305
  %307 = vmatmul.f32.gmra.mxu0 %v116
  %v308 = vpop.f32.mrf.mxu0
  %v309 = vadd.f32 0.0, %v308
  %310 = vmatmul.f32.gmra.mxu0 %v119
  %v311 = vpop.f32.mrf.mxu0
  %v312 = vadd.f32 0.0, %v311
  %313 = vmatmul.f32.gmra.mxu0 %v122
  %v314 = vpop.f32.mrf.mxu0
  %v315 = vadd.f32 0.0, %v314
  %316 = vmatmul.f32.gmra.mxu0 %v125
  %v317 = vpop.f32.mrf.mxu0
  %v318 = vadd.f32 0.0, %v317
  %319 = vmatmul.f32.gmra.mxu0 %v128
  %v320 = vpop.f32.mrf.mxu0
  %v321 = vadd.f32 0.0, %v320
  %322 = vmatmul.f32.gmra.mxu0 %v131
  %v323 = vpop.f32.mrf.mxu0
  %v324 = vadd.f32 0.0, %v323
  %325 = vmatmul.f32.gmra.mxu0 %v134
  %v326 = vpop.f32.mrf.mxu0
  %v327 = vadd.f32 0.0, %v326
  %328 = vmatmul.f32.gmra.mxu0 %v137
  %v329 = vpop.f32.mrf.mxu0
  %v330 = vadd.f32 0.0, %v329
  %331 = vmatmul.f32.gmra.mxu0 %v140
  %v332 = vpop.f32.mrf.mxu0
  %v333 = vadd.f32 0.0, %v332
  %334 = vdwg.mxu0
  %335 = vmatpush.msra.mxu0 0.0
  %336 = vmatpush.msra.mxu0 0.0
  %337 = vmatpush.msra.mxu0 0.0
  %338 = vmatpush.msra.mxu0 0.0
  %339 = vmatpush.msra.mxu0 0.0
  %340 = vmatpush.msra.mxu0 0.0
  %341 = vmatpush.msra.mxu0 0.0
  %342 = vmatpush.msra.mxu0 0.0
  %343 = vmatpush.msra.mxu0 0.0
  %344 = vmatpush.msra.mxu0 0.0
  %345 = vmatpush.msra.mxu0 %v90
  %346 = vmatpush.msra.mxu0 %v84
  %347 = vmatpush.msra.mxu0 %v78
  %348 = vmatpush.msra.mxu0 %v72
  %349 = vmatpush.msra.mxu0 %v66
  %350 = vmatpush.msra.mxu0 %v60
  %351 = vmatmul.f32.gmra.mxu0 %v95
  %v352 = vpop.f32.mrf.mxu0
  %v353 = vadd.f32 0.0, %v352
  %354 = vmatmul.f32.gmra.mxu0 %v98
  %v355 = vpop.f32.mrf.mxu0
  %v356 = vadd.f32 0.0, %v355
  %357 = vmatmul.f32.gmra.mxu0 %v101
  %v358 = vpop.f32.mrf.mxu0
  %v359 = vadd.f32 0.0, %v358
  %360 = vmatmul.f32.gmra.mxu0 %v104
  %v361 = vpop.f32.mrf.mxu0
  %v362 = vadd.f32 0.0, %v361
  %363 = vmatmul.f32.gmra.mxu0 %v107
  %v364 = vpop.f32.mrf.mxu0
  %v365 = vadd.f32 0.0, %v364
  %366 = vmatmul.f32.gmra.mxu0 %v110
  %v367 = vpop.f32.mrf.mxu0
  %v368 = vadd.f32 0.0, %v367
  %369 = vmatmul.f32.gmra.mxu0 %v113
  %v370 = vpop.f32.mrf.mxu0
  %v371 = vadd.f32 0.0, %v370
  %372 = vmatmul.f32.gmra.mxu0 %v116
  %v373 = vpop.f32.mrf.mxu0
  %v374 = vadd.f32 0.0, %v373
  %375 = vmatmul.f32.gmra.mxu0 %v119
  %v376 = vpop.f32.mrf.mxu0
  %v377 = vadd.f32 0.0, %v376
  %378 = vmatmul.f32.gmra.mxu0 %v122
  %v379 = vpop.f32.mrf.mxu0
  %v380 = vadd.f32 0.0, %v379
  %381 = vmatmul.f32.gmra.mxu0 %v125
  %v382 = vpop.f32.mrf.mxu0
  %v383 = vadd.f32 0.0, %v382
  %384 = vmatmul.f32.gmra.mxu0 %v128
  %v385 = vpop.f32.mrf.mxu0
  %v386 = vadd.f32 0.0, %v385
  %387 = vmatmul.f32.gmra.mxu0 %v131
  %v388 = vpop.f32.mrf.mxu0
  %v389 = vadd.f32 0.0, %v388
  %390 = vmatmul.f32.gmra.mxu0 %v134
  %v391 = vpop.f32.mrf.mxu0
  %v392 = vadd.f32 0.0, %v391
  %393 = vmatmul.f32.gmra.mxu0 %v137
  %v394 = vpop.f32.mrf.mxu0
  %v395 = vadd.f32 0.0, %v394
  %396 = vmatmul.f32.gmra.mxu0 %v140
  %v397 = vpop.f32.mrf.mxu0
  %v398 = vadd.f32 0.0, %v397
  %399 = vdwg.mxu0
  %400 = vmatpush.msra.mxu0 0.0
  %401 = vmatpush.msra.mxu0 0.0
  %402 = vmatpush.msra.mxu0 0.0
  %403 = vmatpush.msra.mxu0 0.0
  %404 = vmatpush.msra.mxu0 0.0
  %405 = vmatpush.msra.mxu0 0.0
  %406 = vmatpush.msra.mxu0 0.0
  %407 = vmatpush.msra.mxu0 0.0
  %408 = vmatpush.msra.mxu0 0.0
  %409 = vmatpush.msra.mxu0 0.0
  %410 = vmatpush.msra.mxu0 %v91
  %411 = vmatpush.msra.mxu0 %v85
  %412 = vmatpush.msra.mxu0 %v79
  %413 = vmatpush.msra.mxu0 %v73
  %414 = vmatpush.msra.mxu0 %v67
  %415 = vmatpush.msra.mxu0 %v61
  %416 = vmatmul.f32.gmra.mxu0 %v95
  %v417 = vpop.f32.mrf.mxu0
  %418 = vmatmul.f32.gmra.mxu0 %v98
  %v419 = vpop.f32.mrf.mxu0
  %v420 = vadd.f32 0.0, %v419
  %421 = vmatmul.f32.gmra.mxu0 %v101
  %v422 = vpop.f32.mrf.mxu0
  %v423 = vadd.f32 0.0, %v422
  %424 = vmatmul.f32.gmra.mxu0 %v104
  %v425 = vpop.f32.mrf.mxu0
  %v426 = vadd.f32 0.0, %v425
  %427 = vmatmul.f32.gmra.mxu0 %v107
  %v428 = vpop.f32.mrf.mxu0
  %v429 = vadd.f32 0.0, %v428
  %430 = vmatmul.f32.gmra.mxu0 %v110
  %v431 = vpop.f32.mrf.mxu0
  %v432 = vadd.f32 0.0, %v431
  %433 = vmatmul.f32.gmra.mxu0 %v113
  %v434 = vpop.f32.mrf.mxu0
  %v435 = vadd.f32 0.0, %v434
  %436 = vmatmul.f32.gmra.mxu0 %v116
  %v437 = vpop.f32.mrf.mxu0
  %v438 = vadd.f32 0.0, %v437
  %439 = vmatmul.f32.gmra.mxu0 %v119
  %v440 = vpop.f32.mrf.mxu0
  %v441 = vadd.f32 0.0, %v440
  %442 = vmatmul.f32.gmra.mxu0 %v122
  %v443 = vpop.f32.mrf.mxu0
  %v444 = vadd.f32 0.0, %v443
  %445 = vmatmul.f32.gmra.mxu0 %v125
  %v446 = vpop.f32.mrf.mxu0
  %v447 = vadd.f32 0.0, %v446
  %448 = vmatmul.f32.gmra.mxu0 %v128
  %v449 = vpop.f32.mrf.mxu0
  %v450 = vadd.f32 0.0, %v449
  %451 = vmatmul.f32.gmra.mxu0 %v131
  %v452 = vpop.f32.mrf.mxu0
  %v453 = vadd.f32 0.0, %v452
  %454 = vmatmul.f32.gmra.mxu0 %v134
  %v455 = vpop.f32.mrf.mxu0
  %v456 = vadd.f32 0.0, %v455
  %457 = vmatmul.f32.gmra.mxu0 %v137
  %v458 = vpop.f32.mrf.mxu0
  %v459 = vadd.f32 0.0, %v458
  %460 = vmatmul.f32.gmra.mxu0 %v140
  %v461 = vpop.f32.mrf.mxu0
  %v462 = vadd.f32 0.0, %v461
  %463 = vdwg.mxu0
  %464 = vmatpush.msra.mxu0 0.0
  %465 = vmatpush.msra.mxu0 0.0
  %466 = vmatpush.msra.mxu0 0.0
  %467 = vmatpush.msra.mxu0 0.0
  %468 = vmatpush.msra.mxu0 0.0
  %469 = vmatpush.msra.mxu0 0.0
  %470 = vmatpush.msra.mxu0 0.0
  %471 = vmatpush.msra.mxu0 0.0
  %472 = vmatpush.msra.mxu0 0.0
  %473 = vmatpush.msra.mxu0 0.0
  %474 = vmatpush.msra.mxu0 %v92
  %475 = vmatpush.msra.mxu0 %v86
  %476 = vmatpush.msra.mxu0 %v80
  %477 = vmatpush.msra.mxu0 %v74
  %478 = vmatpush.msra.mxu0 %v68
  %479 = vmatpush.msra.mxu0 %v62
  %480 = vmatmul.f32.gmra.mxu0 %v95
  %v481 = vpop.f32.mrf.mxu0
  %482 = vmatmul.f32.gmra.mxu0 %v98
  %v483 = vpop.f32.mrf.mxu0
  %v484 = vadd.f32 0.0, %v483
  %485 = vmatmul.f32.gmra.mxu0 %v101
  %v486 = vpop.f32.mrf.mxu0
  %v487 = vadd.f32 0.0, %v486
  %488 = vmatmul.f32.gmra.mxu0 %v104
  %v489 = vpop.f32.mrf.mxu0
  %v490 = vadd.f32 0.0, %v489
  %491 = vmatmul.f32.gmra.mxu0 %v107
  %v492 = vpop.f32.mrf.mxu0
  %v493 = vadd.f32 0.0, %v492
  %494 = vmatmul.f32.gmra.mxu0 %v110
  %v495 = vpop.f32.mrf.mxu0
  %v496 = vadd.f32 0.0, %v495
  %497 = vmatmul.f32.gmra.mxu0 %v113
  %v498 = vpop.f32.mrf.mxu0
  %v499 = vadd.f32 0.0, %v498
  %500 = vmatmul.f32.gmra.mxu0 %v116
  %v501 = vpop.f32.mrf.mxu0
  %v502 = vadd.f32 0.0, %v501
  %503 = vmatmul.f32.gmra.mxu0 %v119
  %v504 = vpop.f32.mrf.mxu0
  %v505 = vadd.f32 0.0, %v504
  %506 = vmatmul.f32.gmra.mxu0 %v122
  %v507 = vpop.f32.mrf.mxu0
  %v508 = vadd.f32 0.0, %v507
  %509 = vmatmul.f32.gmra.mxu0 %v125
  %v510 = vpop.f32.mrf.mxu0
  %v511 = vadd.f32 0.0, %v510
  %512 = vmatmul.f32.gmra.mxu0 %v128
  %v513 = vpop.f32.mrf.mxu0
  %v514 = vadd.f32 0.0, %v513
  %515 = vmatmul.f32.gmra.mxu0 %v131
  %v516 = vpop.f32.mrf.mxu0
  %v517 = vadd.f32 0.0, %v516
  %518 = vmatmul.f32.gmra.mxu0 %v134
  %v519 = vpop.f32.mrf.mxu0
  %v520 = vadd.f32 0.0, %v519
  %521 = vmatmul.f32.gmra.mxu0 %v137
  %v522 = vpop.f32.mrf.mxu0
  %v523 = vadd.f32 0.0, %v522
  %524 = vmatmul.f32.gmra.mxu0 %v140
  %v525 = vpop.f32.mrf.mxu0
  %v526 = vadd.f32 0.0, %v525
  %527 = vdwg.mxu0
  %v528 = vadd.f32 %v288, 0.0
  %v529 = vadd.f32 %v353, 0.0
  %v530 = vadd.f32 %v160, %v291
  %v531 = vadd.f32 %v224, %v356
  %v532 = vadd.f32 %v163, %v294
  %v533 = vadd.f32 %v227, %v359
  %v534 = vadd.f32 %v166, %v297
  %v535 = vadd.f32 %v230, %v362
  %v536 = vadd.f32 %v169, %v300
  %v537 = vadd.f32 %v233, %v365
  %v538 = vadd.f32 %v172, %v303
  %v539 = vadd.f32 %v236, %v368
  %v540 = vadd.f32 %v175, %v306
  %v541 = vadd.f32 %v239, %v371
  %v542 = vadd.f32 %v178, %v309
  %v543 = vadd.f32 %v242, %v374
  %v544 = vadd.f32 %v181, %v312
  %v545 = vadd.f32 %v245, %v377
  %v546 = vadd.f32 %v184, %v315
  %v547 = vadd.f32 %v248, %v380
  %v548 = vadd.f32 %v187, %v318
  %v549 = vadd.f32 %v251, %v383
  %v550 = vadd.f32 %v190, %v321
  %v551 = vadd.f32 %v254, %v386
  %v552 = vadd.f32 %v193, %v324
  %v553 = vadd.f32 %v257, %v389
  %v554 = vadd.f32 %v196, %v327
  %v555 = vadd.f32 %v260, %v392
  %v556 = vadd.f32 %v199, %v330
  %v557 = vadd.f32 %v263, %v395
  %v558 = vadd.f32 %v202, %v333
  %v559 = vadd.f32 %v266, %v398
  %v560 = vadd.f32 %v528, %v420
  %v561 = vadd.f32 %v529, %v484
  %v562 = vadd.f32 %v530, %v423
  %v563 = vadd.f32 %v531, %v487
  %v564 = vadd.f32 %v532, %v426
  %v565 = vadd.f32 %v533, %v490
  %v566 = vadd.f32 %v534, %v429
  %v567 = vadd.f32 %v535, %v493
  %v568 = vadd.f32 %v536, %v432
  %v569 = vadd.f32 %v537, %v496
  %v570 = vadd.f32 %v538, %v435
  %v571 = vadd.f32 %v539, %v499
  %v572 = vadd.f32 %v540, %v438
  %v573 = vadd.f32 %v541, %v502
  %v574 = vadd.f32 %v542, %v441
  %v575 = vadd.f32 %v543, %v505
  %v576 = vadd.f32 %v544, %v444
  %v577 = vadd.f32 %v545, %v508
  %v578 = vadd.f32 %v546, %v447
  %v579 = vadd.f32 %v547, %v511
  %v580 = vadd.f32 %v548, %v450
  %v581 = vadd.f32 %v549, %v514
  %v582 = vadd.f32 %v550, %v453
  %v583 = vadd.f32 %v551, %v517
  %v584 = vadd.f32 %v552, %v456
  %v585 = vadd.f32 %v553, %v520
  %v586 = vadd.f32 %v554, %v459
  %v587 = vadd.f32 %v555, %v523
  %v588 = vadd.f32 %v556, %v462
  %v589 = vadd.f32 %v557, %v526
  %v590 = vadd.f32 %v558, 0.0
  %v591 = vadd.f32 %v559, 0.0
  %v592 = vld [vmem:[%s2] sm:$0x3]
  %v594 = vperm.slane %v592, 0
  %v595 = vperm.slane %v592, 1
  %v598 = vadd.f32 %v560, %v594
  %v599 = vadd.f32 %v561, %v595
  %v600 = vadd.f32 %v562, %v594
  %v601 = vadd.f32 %v563, %v595
  %v602 = vadd.f32 %v564, %v594
  %v603 = vadd.f32 %v565, %v595
  %v604 = vadd.f32 %v566, %v594
  %v605 = vadd.f32 %v567, %v595
  %v606 = vadd.f32 %v568, %v594
  %v607 = vadd.f32 %v569, %v595
  %v608 = vadd.f32 %v570, %v594
  %v609 = vadd.f32 %v571, %v595
  %v610 = vadd.f32 %v572, %v594
  %v611 = vadd.f32 %v573, %v595
  %v612 = vadd.f32 %v574, %v594
  %v613 = vadd.f32 %v575, %v595
  %v614 = vadd.f32 %v576, %v594
  %v615 = vadd.f32 %v577, %v595
  %v616 = vadd.f32 %v578, %v594
  %v617 = vadd.f32 %v579, %v595
  %v618 = vadd.f32 %v580, %v594
  %v619 = vadd.f32 %v581, %v595
  %v620 = vadd.f32 %v582, %v594
  %v621 = vadd.f32 %v583, %v595
  %v622 = vadd.f32 %v584, %v594
  %v623 = vadd.f32 %v585, %v595
  %v624 = vadd.f32 %v586, %v594
  %v625 = vadd.f32 %v587, %v595
  %v626 = vadd.f32 %v588, %v594
  %v627 = vadd.f32 %v589, %v595
  %v628 = vadd.f32 %v590, %v594
  %v629 = vadd.f32 %v591, %v595
  %v630 = vmax.f32 %v598, 0.0
  %v631 = vmax.f32 %v599, 0.0
  %v632 = vmax.f32 %v600, 0.0
  %v633 = vmax.f32 %v601, 0.0
  %v634 = vmax.f32 %v602, 0.0
  %v635 = vmax.f32 %v603, 0.0
  %v636 = vmax.f32 %v604, 0.0
  %v637 = vmax.f32 %v605, 0.0
  %v638 = vmax.f32 %v606, 0.0
  %v639 = vmax.f32 %v607, 0.0
  %v640 = vmax.f32 %v608, 0.0
  %v641 = vmax.f32 %v609, 0.0
  %v642 = vmax.f32 %v610, 0.0
  %v643 = vmax.f32 %v611, 0.0
  %v644 = vmax.f32 %v612, 0.0
  %v645 = vmax.f32 %v613, 0.0
  %v646 = vmax.f32 %v614, 0.0
  %v647 = vmax.f32 %v615, 0.0
  %v648 = vmax.f32 %v616, 0.0
  %v649 = vmax.f32 %v617, 0.0
  %v650 = vmax.f32 %v618, 0.0
  %v651 = vmax.f32 %v619, 0.0
  %v652 = vmax.f32 %v620, 0.0
  %v653 = vmax.f32 %v621, 0.0
  %v654 = vmax.f32 %v622, 0.0
  %v655 = vmax.f32 %v623, 0.0
  %v656 = vmax.f32 %v624, 0.0
  %v657 = vmax.f32 %v625, 0.0
  %v658 = vmax.f32 %v626, 0.0
  %v659 = vmax.f32 %v627, 0.0
  %v660 = vmax.f32 %v628, 0.0
  %v661 = vmax.f32 %v629, 0.0
  %v662 = vmax.f32 %v630, %v632
  %v663 = vmax.f32 %v631, %v633
  %v664 = vmax.f32 %v634, %v636
  %v665 = vmax.f32 %v635, %v637
  %v666 = vmax.f32 %v638, %v640
  %v667 = vmax.f32 %v639, %v641
  %v668 = vmax.f32 %v642, %v644
  %v669 = vmax.f32 %v643, %v645
  %v670 = vmax.f32 %v646, %v648
  %v671 = vmax.f32 %v647, %v649
  %v672 = vmax.f32 %v650, %v652
  %v673 = vmax.f32 %v651, %v653
  %v674 = vmax.f32 %v654, %v656
  %v675 = vmax.f32 %v655, %v657
  %v676 = vmax.f32 %v658, %v660
  %v677 = vmax.f32 %v659, %v661
  %v678 = vmax.f32 %v662, %v663
  %v679 = vmax.f32 %v664, %v665
  %v680 = vmax.f32 %v666, %v667
  %v681 = vmax.f32 %v668, %v669
  %v682 = vmax.f32 %v670, %v671
  %v683 = vmax.f32 %v672, %v673
  %v684 = vmax.f32 %v674, %v675
  %v685 = vmax.f32 %v676, %v677
  %v686 = vld [vmem:[%s3] sm:$0xff]
  %v687 = vld [vmem:[%s3 + $0x8] sm:$0xff]
  %v688 = vld [vmem:[%s3 + $0x10] sm:$0xff]
  %v689 = vld [vmem:[%s3 + $0x18] sm:$0xff]
  %v690 = vld [vmem:[%s3 + $0x20] sm:$0xff]
  %v691 = vld [vmem:[%s3 + $0x28] sm:$0xff]
  %v692 = vld [vmem:[%s3 + $0x30] sm:$0xff]
  %v693 = vld [vmem:[%s3 + $0x38] sm:$0xff]
  %v694 = vld [vmem:[%s3 + $0x40] sm:$0xff]
  %v695 = vld [vmem:[%s3 + $0x48] sm:$0xff]
  %v696 = vld [vmem:[%s3 + $0x50] sm:$0xff]
  %v697 = vld [vmem:[%s3 + $0x58] sm:$0xff]
  %v698 = vld [vmem:[%s3 + $0x60] sm:$0xff]
  %v699 = vld [vmem:[%s3 + $0x68] sm:$0xff]
  %v700 = vld [vmem:[%s3 + $0x70] sm:$0xff]
  %v701 = vld [vmem:[%s3 + $0x78] sm:$0xff]
  %v702 = vld [vmem:[%s3 + $0x80] sm:$0xff]
  %v703 = vld [vmem:[%s3 + $0x88] sm:$0xff]
  %v704 = vld [vmem:[%s3 + $0x90] sm:$0xff]
  %v705 = vld [vmem:[%s3 + $0x98] sm:$0xff]
  %v706 = vld [vmem:[%s3 + $0xa0] sm:$0xff]
  %v707 = vld [vmem:[%s3 + $0xa8] sm:$0xff]
  %v708 = vld [vmem:[%s3 + $0xb0] sm:$0xff]
  %v709 = vld [vmem:[%s3 + $0xb8] sm:$0xff]
  %v710 = vld [vmem:[%s3 + $0xc0] sm:$0xff]
  %v711 = vld [vmem:[%s3 + $0xc8] sm:$0xff]
  %v712 = vld [vmem:[%s3 + $0xd0] sm:$0xff]
  %v713 = vld [vmem:[%s3 + $0xd8] sm:$0xff]
  %v714 = vld [vmem:[%s3 + $0xe0] sm:$0xff]
  %v715 = vld [vmem:[%s3 + $0xe8] sm:$0xff]
  %v716 = vld [vmem:[%s3 + $0xf0] sm:$0xff]
  %v717 = vld [vmem:[%s3 + $0xf8] sm:$0xff]
  %v718 = vld [vmem:[%s3 + $0x100] sm:$0xff]
  %v719 = vld [vmem:[%s3 + $0x108] sm:$0xff]
  %v720 = vld [vmem:[%s3 + $0x110] sm:$0xff]
  %v721 = vld [vmem:[%s3 + $0x118] sm:$0xff]
  %v722 = vld [vmem:[%s3 + $0x120] sm:$0xff]
  %v723 = vld [vmem:[%s3 + $0x128] sm:$0xff]
  %v724 = vld [vmem:[%s3 + $0x130] sm:$0xff]
  %v725 = vld [vmem:[%s3 + $0x138] sm:$0xff]
  %v726 = vld [vmem:[%s3 + $0x140] sm:$0xff]
  %v727 = vld [vmem:[%s3 + $0x148] sm:$0xff]
  %v728 = vld [vmem:[%s3 + $0x150] sm:$0xff]
  %v729 = vld [vmem:[%s3 + $0x158] sm:$0xff]
  %v730 = vld [vmem:[%s3 + $0x160] sm:$0xff]
  %v731 = vld [vmem:[%s3 + $0x168] sm:$0xff]
  %v732 = vld [vmem:[%s3 + $0x170] sm:$0xff]
  %v733 = vld [vmem:[%s3 + $0x178] sm:$0xff]
  %v734 = vld [vmem:[%s3 + $0x180] sm:$0xff]
  %v735 = vld [vmem:[%s3 + $0x188] sm:$0xff]
  %v736 = vld [vmem:[%s3 + $0x190] sm:$0xff]
  %v737 = vld [vmem:[%s3 + $0x198] sm:$0xff]
  %v738 = vld [vmem:[%s3 + $0x1a0] sm:$0xff]
  %v739 = vld [vmem:[%s3 + $0x1a8] sm:$0xff]
  %v740 = vld [vmem:[%s3 + $0x1b0] sm:$0xff]
  %v741 = vld [vmem:[%s3 + $0x1b8] sm:$0xff]
  %v742 = vld [vmem:[%s3 + $0x1c0] sm:$0xff]
  %v743 = vld [vmem:[%s3 + $0x1c8] sm:$0xff]
  %v744 = vld [vmem:[%s3 + $0x1d0] sm:$0xff]
  %v745 = vld [vmem:[%s3 + $0x1d8] sm:$0xff]
  %v746 = vld [vmem:[%s3 + $0x1e0] sm:$0xff]
  %v747 = vld [vmem:[%s3 + $0x1e8] sm:$0xff]
  %v748 = vld [vmem:[%s3 + $0x1f0] sm:$0xff]
  %v749 = vld [vmem:[%s3 + $0x1f8] sm:$0xff]
  %v750 = vld [vmem:[%s3 + $0x200] sm:$0xff]
  %v751 = vld [vmem:[%s3 + $0x208] sm:$0xff]
  %v752 = vld [vmem:[%s3 + $0x210] sm:$0xff]
  %v753 = vld [vmem:[%s3 + $0x218] sm:$0xff]
  %v754 = vld [vmem:[%s3 + $0x220] sm:$0xff]
  %v755 = vld [vmem:[%s3 + $0x228] sm:$0xff]
  %v756 = vld [vmem:[%s3 + $0x230] sm:$0xff]
  %v757 = vld [vmem:[%s3 + $0x238] sm:$0xff]
  %v758 = vld [vmem:[%s3 + $0x240] sm:$0xff]
  %v759 = vld [vmem:[%s3 + $0x248] sm:$0xff]
  %v760 = vld [vmem:[%s3 + $0x250] sm:$0xff]
  %v761 = vld [vmem:[%s3 + $0x258] sm:$0xff]
  %v762 = vld [vmem:[%s3 + $0x260] sm:$0xff]
  %v763 = vld [vmem:[%s3 + $0x268] sm:$0xff]
  %v764 = vld [vmem:[%s3 + $0x270] sm:$0xff]
  %v765 = vld [vmem:[%s3 + $0x278] sm:$0xff]
  %v766 = vld [vmem:[%s3 + $0x280] sm:$0xff]
  %v767 = vld [vmem:[%s3 + $0x288] sm:$0xff]
  %v768 = vld [vmem:[%s3 + $0x290] sm:$0xff]
  %v769 = vld [vmem:[%s3 + $0x298] sm:$0xff]
  %v770 = vld [vmem:[%s3 + $0x2a0] sm:$0xff]
  %v771 = vld [vmem:[%s3 + $0x2a8] sm:$0xff]
  %v772 = vld [vmem:[%s3 + $0x2b0] sm:$0xff]
  %v773 = vld [vmem:[%s3 + $0x2b8] sm:$0xff]
  %v774 = vld [vmem:[%s3 + $0x2c0] sm:$0xff]
  %v775 = vld [vmem:[%s3 + $0x2c8] sm:$0xff]
  %v776 = vld [vmem:[%s3 + $0x2d0] sm:$0xff]
  %v777 = vld [vmem:[%s3 + $0x2d8] sm:$0xff]
  %v778 = vld [vmem:[%s3 + $0x2e0] sm:$0xff]
  %v779 = vld [vmem:[%s3 + $0x2e8] sm:$0xff]
  %v780 = vld [vmem:[%s3 + $0x2f0] sm:$0xff]
  %v781 = vld [vmem:[%s3 + $0x2f8] sm:$0xff]
  %782 = vmatpush.msra.mxu0 %v776
  %783 = vmatpush.msra.mxu0 %v770
  %784 = vmatpush.msra.mxu0 %v764
  %785 = vmatpush.msra.mxu0 %v758
  %786 = vmatpush.msra.mxu0 %v752
  %787 = vmatpush.msra.mxu0 %v746
  %788 = vmatpush.msra.mxu0 %v740
  %789 = vmatpush.msra.mxu0 %v734
  %790 = vmatpush.msra.mxu0 %v728
  %791 = vmatpush.msra.mxu0 %v722
  %792 = vmatpush.msra.mxu0 %v716
  %793 = vmatpush.msra.mxu0 %v710
  %794 = vmatpush.msra.mxu0 %v704
  %795 = vmatpush.msra.mxu0 %v698
  %796 = vmatpush.msra.mxu0 %v692
  %797 = vmatpush.msra.mxu0 %v686
  %798 = vmatmul.f32.gmra.mxu0 %v678
  %v799 = vpop.f32.mrf.mxu0
  %v800 = vadd.f32 0.0, %v799
  %801 = vmatmul.f32.gmra.mxu0 %v679
  %v802 = vpop.f32.mrf.mxu0
  %v803 = vadd.f32 0.0, %v802
  %804 = vmatmul.f32.gmra.mxu0 %v680
  %v805 = vpop.f32.mrf.mxu0
  %v806 = vadd.f32 0.0, %v805
  %807 = vmatmul.f32.gmra.mxu0 %v681
  %v808 = vpop.f32.mrf.mxu0
  %v809 = vadd.f32 0.0, %v808
  %810 = vmatmul.f32.gmra.mxu0 %v682
  %v811 = vpop.f32.mrf.mxu0
  %v812 = vadd.f32 0.0, %v811
  %813 = vmatmul.f32.gmra.mxu0 %v683
  %v814 = vpop.f32.mrf.mxu0
  %v815 = vadd.f32 0.0, %v814
  %816 = vmatmul.f32.gmra.mxu0 %v684
  %v817 = vpop.f32.mrf.mxu0
  %v818 = vadd.f32 0.0, %v817
  %819 = vmatmul.f32.gmra.mxu0 %v685
  %v820 = vpop.f32.mrf.mxu0
  %821 = vdwg.mxu0
  %822 = vmatpush.msra.mxu0 %v777
  %823 = vmatpush.msra.mxu0 %v771
  %824 = vmatpush.msra.mxu0 %v765
  %825 = vmatpush.msra.mxu0 %v759
  %826 = vmatpush.msra.mxu0 %v753
  %827 = vmatpush.msra.mxu0 %v747
  %828 = vmatpush.msra.mxu0 %v741
  %829 = vmatpush.msra.mxu0 %v735
  %830 = vmatpush.msra.mxu0 %v729
  %831 = vmatpush.msra.mxu0 %v723
  %832 = vmatpush.msra.mxu0 %v717
  %833 = vmatpush.msra.mxu0 %v711
  %834 = vmatpush.msra.mxu0 %v705
  %835 = vmatpush.msra.mxu0 %v699
  %836 = vmatpush.msra.mxu0 %v693
  %837 = vmatpush.msra.mxu0 %v687
  %838 = vmatmul.f32.gmra.mxu0 %v678
  %v839 = vpop.f32.mrf.mxu0
  %v840 = vadd.f32 0.0, %v839
  %841 = vmatmul.f32.gmra.mxu0 %v679
  %v842 = vpop.f32.mrf.mxu0
  %v843 = vadd.f32 0.0, %v842
  %844 = vmatmul.f32.gmra.mxu0 %v680
  %v845 = vpop.f32.mrf.mxu0
  %v846 = vadd.f32 0.0, %v845
  %847 = vmatmul.f32.gmra.mxu0 %v681
  %v848 = vpop.f32.mrf.mxu0
  %v849 = vadd.f32 0.0, %v848
  %850 = vmatmul.f32.gmra.mxu0 %v682
  %v851 = vpop.f32.mrf.mxu0
  %v852 = vadd.f32 0.0, %v851
  %853 = vmatmul.f32.gmra.mxu0 %v683
  %v854 = vpop.f32.mrf.mxu0
  %v855 = vadd.f32 0.0, %v854
  %856 = vmatmul.f32.gmra.mxu0 %v684
  %v857 = vpop.f32.mrf.mxu0
  %v858 = vadd.f32 0.0, %v857
  %859 = vmatmul.f32.gmra.mxu0 %v685
  %v860 = vpop.f32.mrf.mxu0
  %861 = vdwg.mxu0
  %862 = vmatpush.msra.mxu0 %v778
  %863 = vmatpush.msra.mxu0 %v772
  %864 = vmatpush.msra.mxu0 %v766
  %865 = vmatpush.msra.mxu0 %v760
  %866 = vmatpush.msra.mxu0 %v754
  %867 = vmatpush.msra.mxu0 %v748
  %868 = vmatpush.msra.mxu0 %v742
  %869 = vmatpush.msra.mxu0 %v736
  %870 = vmatpush.msra.mxu0 %v730
  %871 = vmatpush.msra.mxu0 %v724
  %872 = vmatpush.msra.mxu0 %v718
  %873 = vmatpush.msra.mxu0 %v712
  %874 = vmatpush.msra.mxu0 %v706
  %875 = vmatpush.msra.mxu0 %v700
  %876 = vmatpush.msra.mxu0 %v694
  %877 = vmatpush.msra.mxu0 %v688
  %878 = vmatmul.f32.gmra.mxu0 %v678
  %v879 = vpop.f32.mrf.mxu0
  %v880 = vadd.f32 0.0, %v879
  %881 = vmatmul.f32.gmra.mxu0 %v679
  %v882 = vpop.f32.mrf.mxu0
  %v883 = vadd.f32 0.0, %v882
  %884 = vmatmul.f32.gmra.mxu0 %v680
  %v885 = vpop.f32.mrf.mxu0
  %v886 = vadd.f32 0.0, %v885
  %887 = vmatmul.f32.gmra.mxu0 %v681
  %v888 = vpop.f32.mrf.mxu0
  %v889 = vadd.f32 0.0, %v888
  %890 = vmatmul.f32.gmra.mxu0 %v682
  %v891 = vpop.f32.mrf.mxu0
  %v892 = vadd.f32 0.0, %v891
  %893 = vmatmul.f32.gmra.mxu0 %v683
  %v894 = vpop.f32.mrf.mxu0
  %v895 = vadd.f32 0.0, %v894
  %896 = vmatmul.f32.gmra.mxu0 %v684
  %v897 = vpop.f32.mrf.mxu0
  %v898 = vadd.f32 0.0, %v897
  %899 = vmatmul.f32.gmra.mxu0 %v685
  %v900 = vpop.f32.mrf.mxu0
  %v901 = vadd.f32 0.0, %v900
  %902 = vdwg.mxu0
  %903 = vmatpush.msra.mxu0 %v779
  %904 = vmatpush.msra.mxu0 %v773
  %905 = vmatpush.msra.mxu0 %v767
  %906 = vmatpush.msra.mxu0 %v761
  %907 = vmatpush.msra.mxu0 %v755
  %908 = vmatpush.msra.mxu0 %v749
  %909 = vmatpush.msra.mxu0 %v743
  %910 = vmatpush.msra.mxu0 %v737
  %911 = vmatpush.msra.mxu0 %v731
  %912 = vmatpush.msra.mxu0 %v725
  %913 = vmatpush.msra.mxu0 %v719
  %914 = vmatpush.msra.mxu0 %v713
  %915 = vmatpush.msra.mxu0 %v707
  %916 = vmatpush.msra.mxu0 %v701
  %917 = vmatpush.msra.mxu0 %v695
  %918 = vmatpush.msra.mxu0 %v689
  %919 = vmatmul.f32.gmra.mxu0 %v678
  %v920 = vpop.f32.mrf.mxu0
  %v921 = vadd.f32 0.0, %v920
  %922 = vmatmul.f32.gmra.mxu0 %v679
  %v923 = vpop.f32.mrf.mxu0
  %v924 = vadd.f32 0.0, %v923
  %925 = vmatmul.f32.gmra.mxu0 %v680
  %v926 = vpop.f32.mrf.mxu0
  %v927 = vadd.f32 0.0, %v926
  %928 = vmatmul.f32.gmra.mxu0 %v681
  %v929 = vpop.f32.mrf.mxu0
  %v930 = vadd.f32 0.0, %v929
  %931 = vmatmul.f32.gmra.mxu0 %v682
  %v932 = vpop.f32.mrf.mxu0
  %v933 = vadd.f32 0.0, %v932
  %934 = vmatmul.f32.gmra.mxu0 %v683
  %v935 = vpop.f32.mrf.mxu0
  %v936 = vadd.f32 0.0, %v935
  %937 = vmatmul.f32.gmra.mxu0 %v684
  %v938 = vpop.f32.mrf.mxu0
  %v939 = vadd.f32 0.0, %v938
  %940 = vmatmul.f32.gmra.mxu0 %v685
  %v941 = vpop.f32.mrf.mxu0
  %v942 = vadd.f32 0.0, %v941
  %943 = vdwg.mxu0
  %944 = vmatpush.msra.mxu0 %v780
  %945 = vmatpush.msra.mxu0 %v774
  %946 = vmatpush.msra.mxu0 %v768
  %947 = vmatpush.msra.mxu0 %v762
  %948 = vmatpush.msra.mxu0 %v756
  %949 = vmatpush.msra.mxu0 %v750
  %950 = vmatpush.msra.mxu0 %v744
  %951 = vmatpush.msra.mxu0 %v738
  %952 = vmatpush.msra.mxu0 %v732
  %953 = vmatpush.msra.mxu0 %v726
  %954 = vmatpush.msra.mxu0 %v720
  %955 = vmatpush.msra.mxu0 %v714
  %956 = vmatpush.msra.mxu0 %v708
  %957 = vmatpush.msra.mxu0 %v702
  %958 = vmatpush.msra.mxu0 %v696
  %959 = vmatpush.msra.mxu0 %v690
  %960 = vmatmul.f32.gmra.mxu0 %v678
  %v961 = vpop.f32.mrf.mxu0
  %962 = vmatmul.f32.gmra.mxu0 %v679
  %v963 = vpop.f32.mrf.mxu0
  %v964 = vadd.f32 0.0, %v963
  %965 = vmatmul.f32.gmra.mxu0 %v680
  %v966 = vpop.f32.mrf.mxu0
  %v967 = vadd.f32 0.0, %v966
  %968 = vmatmul.f32.gmra.mxu0 %v681
  %v969 = vpop.f32.mrf.mxu0
  %v970 = vadd.f32 0.0, %v969
  %971 = vmatmul.f32.gmra.mxu0 %v682
  %v972 = vpop.f32.mrf.mxu0
  %v973 = vadd.f32 0.0, %v972
  %974 = vmatmul.f32.gmra.mxu0 %v683
  %v975 = vpop.f32.mrf.mxu0
  %v976 = vadd.f32 0.0, %v975
  %977 = vmatmul.f32.gmra.mxu0 %v684
  %v978 = vpop.f32.mrf.mxu0
  %v979 = vadd.f32 0.0, %v978
  %980 = vmatmul.f32.gmra.mxu0 %v685
  %v981 = vpop.f32.mrf.mxu0
  %v982 = vadd.f32 0.0, %v981
  %983 = vdwg.mxu0
  %984 = vmatpush.msra.mxu0 %v781
  %985 = vmatpush.msra.mxu0 %v775
  %986 = vmatpush.msra.mxu0 %v769
  %987 = vmatpush.msra.mxu0 %v763
  %988 = vmatpush.msra.mxu0 %v757
  %989 = vmatpush.msra.mxu0 %v751
  %990 = vmatpush.msra.mxu0 %v745
  %991 = vmatpush.msra.mxu0 %v739
  %992 = vmatpush.msra.mxu0 %v733
  %993 = vmatpush.msra.mxu0 %v727
  %994 = vmatpush.msra.mxu0 %v721
  %995 = vmatpush.msra.mxu0 %v715
  %996 = vmatpush.msra.mxu0 %v709
  %997 = vmatpush.msra.mxu0 %v703
  %998 = vmatpush.msra.mxu0 %v697
  %999 = vmatpush.msra.mxu0 %v691
  %1000 = vmatmul.f32.gmra.mxu0 %v678
  %v1001 = vpop.f32.mrf.mxu0
  %1002 = vmatmul.f32.gmra.mxu0 %v679
  %v1003 = vpop.f32.mrf.mxu0
  %v1004 = vadd.f32 0.0, %v1003
  %1005 = vmatmul.f32.gmra.mxu0 %v680
  %v1006 = vpop.f32.mrf.mxu0
  %v1007 = vadd.f32 0.0, %v1006
  %1008 = vmatmul.f32.gmra.mxu0 %v681
  %v1009 = vpop.f32.mrf.mxu0
  %v1010 = vadd.f32 0.0, %v1009
  %1011 = vmatmul.f32.gmra.mxu0 %v682
  %v1012 = vpop.f32.mrf.mxu0
  %v1013 = vadd.f32 0.0, %v1012
  %1014 = vmatmul.f32.gmra.mxu0 %v683
  %v1015 = vpop.f32.mrf.mxu0
  %v1016 = vadd.f32 0.0, %v1015
  %1017 = vmatmul.f32.gmra.mxu0 %v684
  %v1018 = vpop.f32.mrf.mxu0
  %v1019 = vadd.f32 0.0, %v1018
  %1020 = vmatmul.f32.gmra.mxu0 %v685
  %v1021 = vpop.f32.mrf.mxu0
  %v1022 = vadd.f32 0.0, %v1021
  %1023 = vdwg.mxu0
  %v1024 = vadd.f32 %v880, 0.0
  %v1025 = vadd.f32 %v921, 0.0
  %v1026 = vadd.f32 %v800, %v883
  %v1027 = vadd.f32 %v840, %v924
  %v1028 = vadd.f32 %v803, %v886
  %v1029 = vadd.f32 %v843, %v927
  %v1030 = vadd.f32 %v806, %v889
  %v1031 = vadd.f32 %v846, %v930
  %v1032 = vadd.f32 %v809, %v892
  %v1033 = vadd.f32 %v849, %v933
  %v1034 = vadd.f32 %v812, %v895
  %v1035 = vadd.f32 %v852, %v936
  %v1036 = vadd.f32 %v815, %v898
  %v1037 = vadd.f32 %v855, %v939
  %v1038 = vadd.f32 %v818, %v901
  %v1039 = vadd.f32 %v858, %v942
  %v1040 = vadd.f32 %v1024, %v964
  %v1041 = vadd.f32 %v1025, %v1004
  %v1042 = vadd.f32 %v1026, %v967
  %v1043 = vadd.f32 %v1027, %v1007
  %v1044 = vadd.f32 %v1028, %v970
  %v1045 = vadd.f32 %v1029, %v1010
  %v1046 = vadd.f32 %v1030, %v973
  %v1047 = vadd.f32 %v1031, %v1013
  %v1048 = vadd.f32 %v1032, %v976
  %v1049 = vadd.f32 %v1033, %v1016
  %v1050 = vadd.f32 %v1034, %v979
  %v1051 = vadd.f32 %v1035, %v1019
  %v1052 = vadd.f32 %v1036, %v982
  %v1053 = vadd.f32 %v1037, %v1022
  %v1054 = vadd.f32 %v1038, 0.0
  %v1055 = vadd.f32 %v1039, 0.0
  %v1056 = vld [vmem:[%s4] sm:$0x3]
  %v1058 = vperm.slane %v1056, 0
  %v1059 = vperm.slane %v1056, 1
  %v1062 = vadd.f32 %v1040, %v1058
  %v1063 = vadd.f32 %v1041, %v1059
  %v1064 = vadd.f32 %v1042, %v1058
  %v1065 = vadd.f32 %v1043, %v1059
  %v1066 = vadd.f32 %v1044, %v1058
  %v1067 = vadd.f32 %v1045, %v1059
  %v1068 = vadd.f32 %v1046, %v1058
  %v1069 = vadd.f32 %v1047, %v1059
  %v1070 = vadd.f32 %v1048, %v1058
  %v1071 = vadd.f32 %v1049, %v1059
  %v1072 = vadd.f32 %v1050, %v1058
  %v1073 = vadd.f32 %v1051, %v1059
  %v1074 = vadd.f32 %v1052, %v1058
  %v1075 = vadd.f32 %v1053, %v1059
  %v1076 = vadd.f32 %v1054, %v1058
  %v1077 = vadd.f32 %v1055, %v1059
  %v1078 = vmax.f32 %v1062, 0.0
  %v1079 = vmax.f32 %v1063, 0.0
  %v1080 = vmax.f32 %v1064, 0.0
  %v1081 = vmax.f32 %v1065, 0.0
  %v1082 = vmax.f32 %v1066, 0.0
  %v1083 = vmax.f32 %v1067, 0.0
  %v1084 = vmax.f32 %v1068, 0.0
  %v1085 = vmax.f32 %v1069, 0.0
  %v1086 = vmax.f32 %v1070, 0.0
  %v1087 = vmax.f32 %v1071, 0.0
  %v1088 = vmax.f32 %v1072, 0.0
  %v1089 = vmax.f32 %v1073, 0.0
  %v1090 = vmax.f32 %v1074, 0.0
  %v1091 = vmax.f32 %v1075, 0.0
  %v1092 = vmax.f32 %v1076, 0.0
  %v1093 = vmax.f32 %v1077, 0.0
  %v1094 = vadd.f32 %v1078, %v1080
  %v1095 = vadd.f32 %v1094, %v1082
  %v1096 = vadd.f32 %v1095, %v1084
  %v1097 = vadd.f32 %v1096, %v1086
  %v1098 = vadd.f32 %v1097, %v1088
  %v1099 = vadd.f32 %v1098, %v1090
  %v1100 = vadd.f32 %v1099, %v1092
  %v1101 = vadd.f32 %v1079, %v1081
  %v1102 = vadd.f32 %v1101, %v1083
  %v1103 = vadd.f32 %v1102, %v1085
  %v1104 = vadd.f32 %v1103, %v1087
  %v1105 = vadd.f32 %v1104, %v1089
  %v1106 = vadd.f32 %v1105, %v1091
  %v1107 = vadd.f32 %v1106, %v1093
  %v1108 = vsel %vm93, %v41, 0.0
  %v1109 = vsel %vm93, %v42, 0.0
  %v1110 = vadd.f32 %v1108, %v1109
  %v1111 = vsel %vm93, %v43, 0.0
  %v1112 = vadd.f32 %v1110, %v1111
  %v1113 = vsel %vm93, %v44, 0.0
  %v1114 = vadd.f32 %v1112, %v1113
  %v1115 = vsel %vm93, %v45, 0.0
  %v1116 = vadd.f32 %v1114, %v1115
  %v1117 = vsel %vm93, %v46, 0.0
  %v1118 = vadd.f32 %v1116, %v1117
  %v1119 = vsel %vm93, %v47, 0.0
  %v1120 = vadd.f32 %v1118, %v1119
  %v1121 = vsel %vm93, %v48, 0.0
  %v1122 = vadd.f32 %v1120, %v1121
  %v1123 = vsel %vm93, %v49, 0.0
  %v1124 = vadd.f32 %v1122, %v1123
  %v1125 = vsel %vm93, %v50, 0.0
  %v1126 = vadd.f32 %v1124, %v1125
  %v1127 = vsel %vm93, %v51, 0.0
  %v1128 = vadd.f32 %v1126, %v1127
  %v1129 = vsel %vm93, %v52, 0.0
  %v1130 = vadd.f32 %v1128, %v1129
  %v1131 = vsel %vm93, %v53, 0.0
  %v1132 = vadd.f32 %v1130, %v1131
  %v1133 = vsel %vm93, %v54, 0.0
  %v1134 = vadd.f32 %v1132, %v1133
  %v1135 = vsel %vm93, %v55, 0.0
  %v1136 = vadd.f32 %v1134, %v1135
  %v1137 = vsel %vm93, %v56, 0.0
  %v1138 = vadd.f32 %v1136, %v1137
  %v1139 = vld [vmem:[%s5] sm:$0xff]
  %v1140 = vld [vmem:[%s5 + $0x8] sm:$0xff]
  %v1141 = vld [vmem:[%s5 + $0x10] sm:$0xff]
  %v1142 = vld [vmem:[%s5 + $0x18] sm:$0xff]
  %v1143 = vld [vmem:[%s5 + $0x20] sm:$0xff]
  %v1144 = vld [vmem:[%s5 + $0x28] sm:$0xff]
  %v1145 = vld [vmem:[%s5 + $0x30] sm:$0xff]
  %v1146 = vld [vmem:[%s5 + $0x38] sm:$0xff]
  %v1147 = vld [vmem:[%s5 + $0x40] sm:$0xff]
  %v1148 = vld [vmem:[%s5 + $0x48] sm:$0xff]
  %v1149 = vld [vmem:[%s5 + $0x50] sm:$0xff]
  %v1150 = vld [vmem:[%s5 + $0x58] sm:$0xff]
  %v1151 = vld [vmem:[%s5 + $0x60] sm:$0xff]
  %v1152 = vld [vmem:[%s5 + $0x68] sm:$0xff]
  %v1153 = vld [vmem:[%s5 + $0x70] sm:$0xff]
  %v1154 = vld [vmem:[%s5 + $0x78] sm:$0xff]
  %v1155 = vld [vmem:[%s5 + $0x80] sm:$0xff]
  %v1156 = vld [vmem:[%s5 + $0x88] sm:$0xff]
  %v1157 = vld [vmem:[%s5 + $0x90] sm:$0xff]
  %v1158 = vld [vmem:[%s5 + $0x98] sm:$0xff]
  %v1159 = vld [vmem:[%s5 + $0xa0] sm:$0xff]
  %v1160 = vld [vmem:[%s5 + $0xa8] sm:$0xff]
  %v1161 = vld [vmem:[%s5 + $0xb0] sm:$0xff]
  %v1162 = vld [vmem:[%s5 + $0xb8] sm:$0xff]
  %v1163 = vld [vmem:[%s5 + $0xc0] sm:$0xff]
  %v1164 = vld [vmem:[%s5 + $0xc8] sm:$0xff]
  %v1165 = vld [vmem:[%s5 + $0xd0] sm:$0xff]
  %v1166 = vld [vmem:[%s5 + $0xd8] sm:$0xff]
  %v1167 = vld [vmem:[%s5 + $0xe0] sm:$0xff]
  %v1168 = vld [vmem:[%s5 + $0xe8] sm:$0xff]
  %v1169 = vld [vmem:[%s6] sm:$0x1f]
  %v1171 = vperm.slane %v1169, 0
  %v1172 = vperm.slane %v1169, 1
  %v1173 = vperm.slane %v1169, 2
  %v1174 = vperm.slane %v1169, 3
  %v1175 = vperm.slane %v1169, 4
  %v1182 = vsel %vm93, %v1138, 0
  %1184 = vmatpush.msra.mxu0 0.0
  %1185 = vmatpush.msra.mxu0 0.0
  %1186 = vmatpush.msra.mxu0 0.0
  %1187 = vmatpush.msra.mxu0 0.0
  %1188 = vmatpush.msra.mxu0 0.0
  %1189 = vmatpush.msra.mxu0 0.0
  %1190 = vmatpush.msra.mxu0 0.0
  %1191 = vmatpush.msra.mxu0 0.0
  %1192 = vmatpush.msra.mxu0 0.0
  %1193 = vmatpush.msra.mxu0 0.0
  %1194 = vmatpush.msra.mxu0 %v1164
  %1195 = vmatpush.msra.mxu0 %v1159
  %1196 = vmatpush.msra.mxu0 %v1154
  %1197 = vmatpush.msra.mxu0 %v1149
  %1198 = vmatpush.msra.mxu0 %v1144
  %1199 = vmatpush.msra.mxu0 %v1139
  %1200 = vmatmul.f32.gmra.mxu0 %v1182
  %v1201 = vpop.f32.mrf.mxu0
  %v1202 = vadd.f32 %v1171, %v1201
  %1203 = vdwg.mxu0
  %1204 = vmatpush.msra.mxu0 0.0
  %1205 = vmatpush.msra.mxu0 0.0
  %1206 = vmatpush.msra.mxu0 0.0
  %1207 = vmatpush.msra.mxu0 0.0
  %1208 = vmatpush.msra.mxu0 0.0
  %1209 = vmatpush.msra.mxu0 0.0
  %1210 = vmatpush.msra.mxu0 0.0
  %1211 = vmatpush.msra.mxu0 0.0
  %1212 = vmatpush.msra.mxu0 0.0
  %1213 = vmatpush.msra.mxu0 0.0
  %1214 = vmatpush.msra.mxu0 %v1165
  %1215 = vmatpush.msra.mxu0 %v1160
  %1216 = vmatpush.msra.mxu0 %v1155
  %1217 = vmatpush.msra.mxu0 %v1150
  %1218 = vmatpush.msra.mxu0 %v1145
  %1219 = vmatpush.msra.mxu0 %v1140
  %1220 = vmatmul.f32.gmra.mxu0 %v1182
  %v1221 = vpop.f32.mrf.mxu0
  %v1222 = vadd.f32 %v1172, %v1221
  %1223 = vdwg.mxu0
  %1224 = vmatpush.msra.mxu0 0.0
  %1225 = vmatpush.msra.mxu0 0.0
  %1226 = vmatpush.msra.mxu0 0.0
  %1227 = vmatpush.msra.mxu0 0.0
  %1228 = vmatpush.msra.mxu0 0.0
  %1229 = vmatpush.msra.mxu0 0.0
  %1230 = vmatpush.msra.mxu0 0.0
  %1231 = vmatpush.msra.mxu0 0.0
  %1232 = vmatpush.msra.mxu0 0.0
  %1233 = vmatpush.msra.mxu0 0.0
  %1234 = vmatpush.msra.mxu0 %v1166
  %1235 = vmatpush.msra.mxu0 %v1161
  %1236 = vmatpush.msra.mxu0 %v1156
  %1237 = vmatpush.msra.mxu0 %v1151
  %1238 = vmatpush.msra.mxu0 %v1146
  %1239 = vmatpush.msra.mxu0 %v1141
  %1240 = vmatmul.f32.gmra.mxu0 %v1182
  %v1241 = vpop.f32.mrf.mxu0
  %v1242 = vadd.f32 %v1173, %v1241
  %1243 = vdwg.mxu0
  %1244 = vmatpush.msra.mxu0 0.0
  %1245 = vmatpush.msra.mxu0 0.0
  %1246 = vmatpush.msra.mxu0 0.0
  %1247 = vmatpush.msra.mxu0 0.0
  %1248 = vmatpush.msra.mxu0 0.0
  %1249 = vmatpush.msra.mxu0 0.0
  %1250 = vmatpush.msra.mxu0 0.0
  %1251 = vmatpush.msra.mxu0 0.0
  %1252 = vmatpush.msra.mxu0 0.0
  %1253 = vmatpush.msra.mxu0 0.0
  %1254 = vmatpush.msra.mxu0 %v1167
  %1255 = vmatpush.msra.mxu0 %v1162
  %1256 = vmatpush.msra.mxu0 %v1157
  %1257 = vmatpush.msra.mxu0 %v1152
  %1258 = vmatpush.msra.mxu0 %v1147
  %1259 = vmatpush.msra.mxu0 %v1142
  %1260 = vmatmul.f32.gmra.mxu0 %v1182
  %v1261 = vpop.f32.mrf.mxu0
  %v1262 = vadd.f32 %v1174, %v1261
  %1263 = vdwg.mxu0
  %1264 = vmatpush.msra.mxu0 0.0
  %1265 = vmatpush.msra.mxu0 0.0
  %1266 = vmatpush.msra.mxu0 0.0
  %1267 = vmatpush.msra.mxu0 0.0
  %1268 = vmatpush.msra.mxu0 0.0
  %1269 = vmatpush.msra.mxu0 0.0
  %1270 = vmatpush.msra.mxu0 0.0
  %1271 = vmatpush.msra.mxu0 0.0
  %1272 = vmatpush.msra.mxu0 0.0
  %1273 = vmatpush.msra.mxu0 0.0
  %1274 = vmatpush.msra.mxu0 %v1168
  %1275 = vmatpush.msra.mxu0 %v1163
  %1276 = vmatpush.msra.mxu0 %v1158
  %1277 = vmatpush.msra.mxu0 %v1153
  %1278 = vmatpush.msra.mxu0 %v1148
  %1279 = vmatpush.msra.mxu0 %v1143
  %1280 = vmatmul.f32.gmra.mxu0 %v1182
  %v1281 = vpop.f32.mrf.mxu0
  %v1282 = vadd.f32 %v1175, %v1281
  %1283 = vdwg.mxu0
  %v1284 = vmax.f32 %v1202, 0.0
  %v1285 = vmax.f32 %v1222, 0.0
  %v1286 = vmax.f32 %v1242, 0.0
  %v1287 = vmax.f32 %v1262, 0.0
  %v1288 = vmax.f32 %v1282, 0.0
  %v1289 = vld [vmem:[%s7] sm:$0xff]
  %v1290 = vld [vmem:[%s7 + $0x8] sm:$0xff]
  %v1291 = vld [vmem:[%s7 + $0x10] sm:$0xff]
  %v1292 = vld [vmem:[%s7 + $0x18] sm:$0xff]
  %v1293 = vld [vmem:[%s7 + $0x20] sm:$0xff]
  %v1294 = vld [vmem:[%s7 + $0x28] sm:$0xff]
  %v1295 = vld [vmem:[%s7 + $0x30] sm:$0xff]
  %v1296 = vld [vmem:[%s7 + $0x38] sm:$0xff]
  %v1297 = vld [vmem:[%s7 + $0x40] sm:$0xff]
  %v1298 = vld [vmem:[%s7 + $0x48] sm:$0xff]
  %v1299 = vld [vmem:[%s7 + $0x50] sm:$0xff]
  %v1300 = vld [vmem:[%s7 + $0x58] sm:$0xff]
  %v1301 = vld [vmem:[%s7 + $0x60] sm:$0xff]
  %v1302 = vld [vmem:[%s7 + $0x68] sm:$0xff]
  %v1303 = vld [vmem:[%s7 + $0x70] sm:$0xff]
  %v1304 = vld [vmem:[%s7 + $0x78] sm:$0xff]
  %v1305 = vld [vmem:[%s7 + $0x80] sm:$0xff]
  %v1306 = vld [vmem:[%s7 + $0x88] sm:$0xff]
  %v1307 = vld [vmem:[%s7 + $0x90] sm:$0xff]
  %v1308 = vld [vmem:[%s7 + $0x98] sm:$0xff]
  %v1309 = vld [vmem:[%s7 + $0xa0] sm:$0xff]
  %v1310 = vld [vmem:[%s7 + $0xa8] sm:$0xff]
  %v1311 = vld [vmem:[%s7 + $0xb0] sm:$0xff]
  %v1312 = vld [vmem:[%s7 + $0xb8] sm:$0xff]
  %v1313 = vld [vmem:[%s7 + $0xc0] sm:$0xff]
  %v1314 = vld [vmem:[%s7 + $0xc8] sm:$0xff]
  %v1315 = vld [vmem:[%s7 + $0xd0] sm:$0xff]
  %v1316 = vld [vmem:[%s7 + $0xd8] sm:$0xff]
  %v1317 = vld [vmem:[%s7 + $0xe0] sm:$0xff]
  %v1318 = vld [vmem:[%s7 + $0xe8] sm:$0xff]
  %v1319 = vld [vmem:[%s7 + $0xf0] sm:$0xff]
  %v1320 = vld [vmem:[%s7 + $0xf8] sm:$0xff]
  %v1321 = vld [vmem:[%s7 + $0x100] sm:$0xff]
  %v1322 = vld [vmem:[%s7 + $0x108] sm:$0xff]
  %v1323 = vld [vmem:[%s7 + $0x110] sm:$0xff]
  %v1324 = vld [vmem:[%s7 + $0x118] sm:$0xff]
  %v1325 = vld [vmem:[%s7 + $0x120] sm:$0xff]
  %v1326 = vld [vmem:[%s7 + $0x128] sm:$0xff]
  %v1327 = vld [vmem:[%s7 + $0x130] sm:$0xff]
  %v1328 = vld [vmem:[%s7 + $0x138] sm:$0xff]
  %v1329 = vld [vmem:[%s7 + $0x140] sm:$0xff]
  %v1330 = vld [vmem:[%s7 + $0x148] sm:$0xff]
  %v1331 = vld [vmem:[%s7 + $0x150] sm:$0xff]
  %v1332 = vld [vmem:[%s7 + $0x158] sm:$0xff]
  %v1333 = vld [vmem:[%s7 + $0x160] sm:$0xff]
  %v1334 = vld [vmem:[%s7 + $0x168] sm:$0xff]
  %v1335 = vld [vmem:[%s7 + $0x170] sm:$0xff]
  %v1336 = vld [vmem:[%s7 + $0x178] sm:$0xff]
  %v1337 = vld [vmem:[%s7 + $0x180] sm:$0xff]
  %v1338 = vld [vmem:[%s7 + $0x188] sm:$0xff]
  %v1339 = vld [vmem:[%s7 + $0x190] sm:$0xff]
  %v1340 = vld [vmem:[%s7 + $0x198] sm:$0xff]
  %v1341 = vld [vmem:[%s7 + $0x1a0] sm:$0xff]
  %v1342 = vld [vmem:[%s7 + $0x1a8] sm:$0xff]
  %v1343 = vld [vmem:[%s7 + $0x1b0] sm:$0xff]
  %v1344 = vld [vmem:[%s7 + $0x1b8] sm:$0xff]
  %v1345 = vld [vmem:[%s7 + $0x1c0] sm:$0xff]
  %v1346 = vld [vmem:[%s7 + $0x1c8] sm:$0xff]
  %v1347 = vld [vmem:[%s7 + $0x1d0] sm:$0xff]
  %v1348 = vld [vmem:[%s7 + $0x1d8] sm:$0xff]
  %v1349 = vld [vmem:[%s7 + $0x1e0] sm:$0xff]
  %v1350 = vld [vmem:[%s7 + $0x1e8] sm:$0xff]
  %v1351 = vld [vmem:[%s7 + $0x1f0] sm:$0xff]
  %v1352 = vld [vmem:[%s7 + $0x1f8] sm:$0xff]
  %v1353 = vld [vmem:[%s7 + $0x200] sm:$0xff]
  %v1354 = vld [vmem:[%s7 + $0x208] sm:$0xff]
  %v1355 = vld [vmem:[%s7 + $0x210] sm:$0xff]
  %v1356 = vld [vmem:[%s7 + $0x218] sm:$0xff]
  %v1357 = vld [vmem:[%s7 + $0x220] sm:$0xff]
  %v1358 = vld [vmem:[%s7 + $0x228] sm:$0xff]
  %v1359 = vld [vmem:[%s7 + $0x230] sm:$0xff]
  %v1360 = vld [vmem:[%s7 + $0x238] sm:$0xff]
  %v1361 = vld [vmem:[%s8] sm:$0xff]
  %v1362 = vld [vmem:[%s8 + $0x8] sm:$0xff]
  %v1363 = vld [vmem:[%s8 + $0x10] sm:$0xff]
  %v1364 = vld [vmem:[%s8 + $0x18] sm:$0xff]
  %v1365 = vld [vmem:[%s8 + $0x20] sm:$0xff]
  %v1366 = vld [vmem:[%s8 + $0x28] sm:$0xff]
  %v1367 = vld [vmem:[%s8 + $0x30] sm:$0xff]
  %v1368 = vld [vmem:[%s8 + $0x38] sm:$0xff]
  %v1369 = vld [vmem:[%s8 + $0x40] sm:$0xff]
  %v1370 = vld [vmem:[%s8 + $0x48] sm:$0xff]
  %v1371 = vld [vmem:[%s8 + $0x50] sm:$0xff]
  %v1372 = vld [vmem:[%s8 + $0x58] sm:$0xff]
  %v1373 = vld [vmem:[%s8 + $0x60] sm:$0xff]
  %v1374 = vld [vmem:[%s8 + $0x68] sm:$0xff]
  %v1375 = vld [vmem:[%s8 + $0x70] sm:$0xff]
  %v1376 = vld [vmem:[%s8 + $0x78] sm:$0xff]
  %v1377 = vld [vmem:[%s8 + $0x80] sm:$0xff]
  %v1378 = vld [vmem:[%s8 + $0x88] sm:$0xff]
  %v1379 = vld [vmem:[%s8 + $0x90] sm:$0xff]
  %v1380 = vld [vmem:[%s8 + $0x98] sm:$0xff]
  %v1381 = vld [vmem:[%s8 + $0xa0] sm:$0xff]
  %v1382 = vld [vmem:[%s8 + $0xa8] sm:$0xff]
  %v1383 = vld [vmem:[%s8 + $0xb0] sm:$0xff]
  %v1384 = vld [vmem:[%s8 + $0xb8] sm:$0xff]
  %v1385 = vld [vmem:[%s8 + $0xc0] sm:$0xff]
  %v1386 = vld [vmem:[%s8 + $0xc8] sm:$0xff]
  %v1387 = vld [vmem:[%s8 + $0xd0] sm:$0xff]
  %v1388 = vld [vmem:[%s8 + $0xd8] sm:$0xff]
  %v1389 = vld [vmem:[%s8 + $0xe0] sm:$0xff]
  %v1390 = vld [vmem:[%s8 + $0xe8] sm:$0xff]
  %v1391 = vld [vmem:[%s8 + $0xf0] sm:$0xff]
  %v1392 = vld [vmem:[%s8 + $0xf8] sm:$0xff]
  %1393 = vmatpush.msra.mxu0 %v1376
  %1394 = vmatpush.msra.mxu0 %v1375
  %1395 = vmatpush.msra.mxu0 %v1374
  %1396 = vmatpush.msra.mxu0 %v1373
  %1397 = vmatpush.msra.mxu0 %v1372
  %1398 = vmatpush.msra.mxu0 %v1371
  %1399 = vmatpush.msra.mxu0 %v1370
  %1400 = vmatpush.msra.mxu0 %v1369
  %1401 = vmatpush.msra.mxu0 %v1368
  %1402 = vmatpush.msra.mxu0 %v1367
  %1403 = vmatpush.msra.mxu0 %v1366
  %1404 = vmatpush.msra.mxu0 %v1365
  %1405 = vmatpush.msra.mxu0 %v1364
  %1406 = vmatpush.msra.mxu0 %v1363
  %1407 = vmatpush.msra.mxu0 %v1362
  %1408 = vmatpush.msra.mxu0 %v1361
  %1409 = vmatmul.f32.gmra.mxu0 %v1100
  %v1410 = vpop.f32.mrf.mxu0
  %v1411 = vadd.f32 0.0, %v1410
  %1412 = vdwg.mxu0
  %1413 = vmatpush.msra.mxu0 %v1392
  %1414 = vmatpush.msra.mxu0 %v1391
  %1415 = vmatpush.msra.mxu0 %v1390
  %1416 = vmatpush.msra.mxu0 %v1389
  %1417 = vmatpush.msra.mxu0 %v1388
  %1418 = vmatpush.msra.mxu0 %v1387
  %1419 = vmatpush.msra.mxu0 %v1386
  %1420 = vmatpush.msra.mxu0 %v1385
  %1421 = vmatpush.msra.mxu0 %v1384
  %1422 = vmatpush.msra.mxu0 %v1383
  %1423 = vmatpush.msra.mxu0 %v1382
  %1424 = vmatpush.msra.mxu0 %v1381
  %1425 = vmatpush.msra.mxu0 %v1380
  %1426 = vmatpush.msra.mxu0 %v1379
  %1427 = vmatpush.msra.mxu0 %v1378
  %1428 = vmatpush.msra.mxu0 %v1377
  %1429 = vmatmul.f32.gmra.mxu0 %v1107
  %v1430 = vpop.f32.mrf.mxu0
  %v1431 = vadd.f32 %v1411, %v1430
  %1432 = vdwg.mxu0
  %vm1433 = vcmask 523264
  %v1435 = vsel %vm1433, %v1288, 0
  %1437 = vmatpush.msra.mxu0 %v1304
  %1438 = vmatpush.msra.mxu0 %v1303
  %1439 = vmatpush.msra.mxu0 %v1302
  %1440 = vmatpush.msra.mxu0 %v1301
  %1441 = vmatpush.msra.mxu0 %v1300
  %1442 = vmatpush.msra.mxu0 %v1299
  %1443 = vmatpush.msra.mxu0 %v1298
  %1444 = vmatpush.msra.mxu0 %v1297
  %1445 = vmatpush.msra.mxu0 %v1296
  %1446 = vmatpush.msra.mxu0 %v1295
  %1447 = vmatpush.msra.mxu0 %v1294
  %1448 = vmatpush.msra.mxu0 %v1293
  %1449 = vmatpush.msra.mxu0 %v1292
  %1450 = vmatpush.msra.mxu0 %v1291
  %1451 = vmatpush.msra.mxu0 %v1290
  %1452 = vmatpush.msra.mxu0 %v1289
  %1453 = vmatmul.f32.gmra.mxu0 %v1284
  %v1454 = vpop.f32.mrf.mxu0
  %v1455 = vadd.f32 %v1431, %v1454
  %1456 = vdwg.mxu0
  %1457 = vmatpush.msra.mxu0 %v1320
  %1458 = vmatpush.msra.mxu0 %v1319
  %1459 = vmatpush.msra.mxu0 %v1318
  %1460 = vmatpush.msra.mxu0 %v1317
  %1461 = vmatpush.msra.mxu0 %v1316
  %1462 = vmatpush.msra.mxu0 %v1315
  %1463 = vmatpush.msra.mxu0 %v1314
  %1464 = vmatpush.msra.mxu0 %v1313
  %1465 = vmatpush.msra.mxu0 %v1312
  %1466 = vmatpush.msra.mxu0 %v1311
  %1467 = vmatpush.msra.mxu0 %v1310
  %1468 = vmatpush.msra.mxu0 %v1309
  %1469 = vmatpush.msra.mxu0 %v1308
  %1470 = vmatpush.msra.mxu0 %v1307
  %1471 = vmatpush.msra.mxu0 %v1306
  %1472 = vmatpush.msra.mxu0 %v1305
  %1473 = vmatmul.f32.gmra.mxu0 %v1285
  %v1474 = vpop.f32.mrf.mxu0
  %v1475 = vadd.f32 %v1455, %v1474
  %1476 = vdwg.mxu0
  %1477 = vmatpush.msra.mxu0 %v1336
  %1478 = vmatpush.msra.mxu0 %v1335
  %1479 = vmatpush.msra.mxu0 %v1334
  %1480 = vmatpush.msra.mxu0 %v1333
  %1481 = vmatpush.msra.mxu0 %v1332
  %1482 = vmatpush.msra.mxu0 %v1331
  %1483 = vmatpush.msra.mxu0 %v1330
  %1484 = vmatpush.msra.mxu0 %v1329
  %1485 = vmatpush.msra.mxu0 %v1328
  %1486 = vmatpush.msra.mxu0 %v1327
  %1487 = vmatpush.msra.mxu0 %v1326
  %1488 = vmatpush.msra.mxu0 %v1325
  %1489 = vmatpush.msra.mxu0 %v1324
  %1490 = vmatpush.msra.mxu0 %v1323
  %1491 = vmatpush.msra.mxu0 %v1322
  %1492 = vmatpush.msra.mxu0 %v1321
  %1493 = vmatmul.f32.gmra.mxu0 %v1286
  %v1494 = vpop.f32.mrf.mxu0
  %v1495 = vadd.f32 %v1475, %v1494
  %1496 = vdwg.mxu0
  %1497 = vmatpush.msra.mxu0 %v1352
  %1498 = vmatpush.msra.mxu0 %v1351
  %1499 = vmatpush.msra.mxu0 %v1350
  %1500 = vmatpush.msra.mxu0 %v1349
  %1501 = vmatpush.msra.mxu0 %v1348
  %1502 = vmatpush.msra.mxu0 %v1347
  %1503 = vmatpush.msra.mxu0 %v1346
  %1504 = vmatpush.msra.mxu0 %v1345
  %1505 = vmatpush.msra.mxu0 %v1344
  %1506 = vmatpush.msra.mxu0 %v1343
  %1507 = vmatpush.msra.mxu0 %v1342
  %1508 = vmatpush.msra.mxu0 %v1341
  %1509 = vmatpush.msra.mxu0 %v1340
  %1510 = vmatpush.msra.mxu0 %v1339
  %1511 = vmatpush.msra.mxu0 %v1338
  %1512 = vmatpush.msra.mxu0 %v1337
  %1513 = vmatmul.f32.gmra.mxu0 %v1287
  %v1514 = vpop.f32.mrf.mxu0
  %v1515 = vadd.f32 %v1495, %v1514
  %1516 = vdwg.mxu0
  %1517 = vmatpush.msra.mxu0 0.0
  %1518 = vmatpush.msra.mxu0 0.0
  %1519 = vmatpush.msra.mxu0 0.0
  %1520 = vmatpush.msra.mxu0 0.0
  %1521 = vmatpush.msra.mxu0 0.0
  %1522 = vmatpush.msra.mxu0 0.0
  %1523 = vmatpush.msra.mxu0 0.0
  %1524 = vmatpush.msra.mxu0 0.0
  %1525 = vmatpush.msra.mxu0 %v1360
  %1526 = vmatpush.msra.mxu0 %v1359
  %1527 = vmatpush.msra.mxu0 %v1358
  %1528 = vmatpush.msra.mxu0 %v1357
  %1529 = vmatpush.msra.mxu0 %v1356
  %1530 = vmatpush.msra.mxu0 %v1355
  %1531 = vmatpush.msra.mxu0 %v1354
  %1532 = vmatpush.msra.mxu0 %v1353
  %1533 = vmatmul.f32.gmra.mxu0 %v1435
  %v1534 = vpop.f32.mrf.mxu0
  %v1535 = vadd.f32 %v1515, %v1534
  %1536 = vdwg.mxu0
  %v1537 = vld [vmem:[%s9] sm:$0x1]
  %v1539 = vperm.slane %v1537, 0
  %v1541 = vadd.f32 %v1535, %v1539
  %v1542 = vmax.f32 %v1541, 0.0
  %v1543 = vld [vmem:[%s10] sm:$0xff]
  %v1544 = vld [vmem:[%s10 + $0x8] sm:$0xff]
  %v1545 = vld [vmem:[%s10 + $0x10] sm:$0xff]
  %v1546 = vld [vmem:[%s10 + $0x18] sm:$0xff]
  %v1547 = vld [vmem:[%s10 + $0x20] sm:$0xff]
  %v1548 = vld [vmem:[%s10 + $0x28] sm:$0xff]
  %v1549 = vld [vmem:[%s10 + $0x30] sm:$0xff]
  %v1550 = vld [vmem:[%s10 + $0x38] sm:$0xff]
  %v1551 = vld [vmem:[%s10 + $0x40] sm:$0xff]
  %v1552 = vld [vmem:[%s10 + $0x48] sm:$0xff]
  %v1553 = vld [vmem:[%s10 + $0x50] sm:$0xff]
  %v1554 = vld [vmem:[%s10 + $0x58] sm:$0xff]
  %v1555 = vld [vmem:[%s10 + $0x60] sm:$0xff]
  %v1556 = vld [vmem:[%s10 + $0x68] sm:$0xff]
  %v1557 = vld [vmem:[%s10 + $0x70] sm:$0xff]
  %v1558 = vld [vmem:[%s10 + $0x78] sm:$0xff]
  %v1559 = vld [vmem:[%s11] sm:$0x1]
  %v1561 = vperm.slane %v1559, 0
  %1563 = vmatpush.msra.mxu0 %v1558
  %1564 = vmatpush.msra.mxu0 %v1557
  %1565 = vmatpush.msra.mxu0 %v1556
  %1566 = vmatpush.msra.mxu0 %v1555
  %1567 = vmatpush.msra.mxu0 %v1554
  %1568 = vmatpush.msra.mxu0 %v1553
  %1569 = vmatpush.msra.mxu0 %v1552
  %1570 = vmatpush.msra.mxu0 %v1551
  %1571 = vmatpush.msra.mxu0 %v1550
  %1572 = vmatpush.msra.mxu0 %v1549
  %1573 = vmatpush.msra.mxu0 %v1548
  %1574 = vmatpush.msra.mxu0 %v1547
  %1575 = vmatpush.msra.mxu0 %v1546
  %1576 = vmatpush.msra.mxu0 %v1545
  %1577 = vmatpush.msra.mxu0 %v1544
  %1578 = vmatpush.msra.mxu0 %v1543
  %1579 = vmatmul.f32.gmra.mxu0 %v1542
  %v1580 = vpop.f32.mrf.mxu0
  %v1581 = vadd.f32 %v1561, %v1580
  %1582 = vdwg.mxu0
  %1583 = vst [vmem:[%s12] sm:$0xff] %v1581
  // Predicated region
  $region50: #{dual_stream_net.1} parent=0 // pred_check
    _
  $region51: #{dual_stream_net.1} parent=0 // pred_check_branch
    %1585 = sbr.rel (0) target = $region53
  $region52: #{dual_stream_net.1} parent=0 // pred_region
    _
  $region53: #{dual_stream_net.1} parent=0 // pred_fallthru
    _
  // Predicated region
  $region54: #{dual_stream_net.1} parent=0 // pred_check
    _
  $region55: #{dual_stream_net.1} parent=0 // pred_check_branch
    %1587 = sbr.rel (0) target = $region57
  $region56: #{dual_stream_net.1} parent=0 // pred_region
    _
  $region57: #{dual_stream_net.1} parent=0 // pred_fallthru
    _

</llo_original>
